<compile_context>
chip_gen: v7x
topology: tpu7x:2x2x1
jax: 0.10.0
libtpu: 0.0.40
codegen_flags: <defaults>
</compile_context>

<pallas_src>
import functools

import jax
import jax.numpy as jnp
import numpy as np
from jax.experimental import pallas as pl
from jax.experimental.pallas import tpu as pltpu


def _temporal_attention_kernel(
    q_ref, k_ref, v_ref,
    wq_ref, bq_ref, wk_ref, bk_ref, wv_ref, bv_ref,
    wfc_ref, bfc_ref, gamma_ref, beta_ref,
    out_ref, *attn_refs,
    n_head, d_k, d_v, inv_temperature, ln_eps,
):
    tb, len_q, rnn = q_ref.shape
    _, len_k, _ = k_ref.shape

    # Fold the batch tile into the matmul M dimension: (tb, len, rnn) -> (tb*len, rnn).
    # Last dim is unchanged, so this is a cheap sublane-only regroup.
    q2 = q_ref[...].reshape(tb * len_q, rnn)
    k2 = k_ref[...].reshape(tb * len_k, rnn)
    v2 = v_ref[...].reshape(tb * len_k, rnn)

    # One wide projection per tensor on the MXU, f32 accumulation.
    Q = jnp.dot(q2, wq_ref[...], preferred_element_type=jnp.float32) + bq_ref[...]
    K = jnp.dot(k2, wk_ref[...], preferred_element_type=jnp.float32) + bk_ref[...]
    V = jnp.dot(v2, wv_ref[...], preferred_element_type=jnp.float32) + bv_ref[...]

    # Per-head attention (static unroll over heads), each head batched over tb.
    # The output projection is accumulated per head from sublane-aligned row
    # slices of Wfc, so no lane-dim concatenate of head outputs is needed.
    o_acc = jnp.zeros((tb * len_q, rnn), jnp.float32)
    for h in range(n_head):
        qh = Q[:, h * d_k:(h + 1) * d_k].reshape(tb, len_q, d_k)
        kh = K[:, h * d_k:(h + 1) * d_k].reshape(tb, len_k, d_k)
        vh = V[:, h * d_v:(h + 1) * d_v].reshape(tb, len_k, d_v)

        s = jnp.einsum("bqd,bkd->bqk", qh, kh,
                       preferred_element_type=jnp.float32) * inv_temperature
        s = s - jnp.max(s, axis=-1, keepdims=True)
        p = jnp.exp(s)
        # TODO(synk): pl.reciprocal(..., approx=True) would use the EUP slot but
        # can drift past the 1e-4 test tolerance; keep exact normalization.
        p = p * pl.reciprocal(jnp.sum(p, axis=-1, keepdims=True), approx=False)

        if attn_refs:
            attn_refs[0][h] = p.astype(attn_refs[0].dtype)  # (tb, len_q, len_k)

        oh = jnp.einsum("bqk,bkd->bqd", p, vh,
                        preferred_element_type=jnp.float32)
        o_acc = o_acc + jnp.dot(oh.reshape(tb * len_q, d_v),
                                wfc_ref[h * d_v:(h + 1) * d_v, :],
                                preferred_element_type=jnp.float32)

    # Bias + residual + LayerNorm (dropout = identity in eval mode).
    o = o_acc + bfc_ref[...] + q2.astype(jnp.float32)
    inv_rnn = jnp.float32(1.0 / rnn)
    mean = jnp.sum(o, axis=-1, keepdims=True) * inv_rnn
    centered = o - mean
    var = jnp.sum(centered * centered, axis=-1, keepdims=True) * inv_rnn
    o = centered * jax.lax.rsqrt(var + ln_eps)
    o = o * gamma_ref[...] + beta_ref[...]

    out_ref[...] = o.reshape(tb, len_q, rnn).astype(out_ref.dtype)


def temporal_attention(q, k, v, params, *, n_head, d_k, d_v,
                       batch_tile=None, return_attn=True):
    """q,k,v: (sz_b, len, rnn_unit). Returns (output, attn) like the torch module
    (or just output if return_attn=False)."""
    sz_b, len_q, rnn_unit = q.shape
    _, len_k, _ = k.shape
    if batch_tile is None:
        batch_tile = sz_b                      # whole batch per grid step
    assert sz_b % batch_tile == 0
    grid = (sz_b // batch_tile,)

    inv_temperature = float(1.0 / np.power(d_k, 0.5))

    kernel = functools.partial(
        _temporal_attention_kernel,
        n_head=n_head, d_k=d_k, d_v=d_v,
        inv_temperature=inv_temperature, ln_eps=1e-5,
    )

    const2d = lambda shape: pl.BlockSpec(shape, lambda b: (0, 0))
    act_spec = lambda L: pl.BlockSpec((batch_tile, L, rnn_unit), lambda b: (b, 0, 0))

    in_specs = [
        act_spec(len_q),                    # q
        act_spec(len_k),                    # k
        act_spec(len_k),                    # v
        const2d((rnn_unit, n_head * d_k)),  # Wq^T
        const2d((1, n_head * d_k)),         # bq
        const2d((rnn_unit, n_head * d_k)),  # Wk^T
        const2d((1, n_head * d_k)),         # bk
        const2d((rnn_unit, n_head * d_v)),  # Wv^T
        const2d((1, n_head * d_v)),         # bv
        const2d((n_head * d_v, rnn_unit)),  # Wfc^T
        const2d((1, rnn_unit)),             # bfc
        const2d((1, rnn_unit)),             # ln gamma
        const2d((1, rnn_unit)),             # ln beta
    ]

    out_block = pl.BlockSpec((batch_tile, len_q, rnn_unit), lambda b: (b, 0, 0))
    if return_attn:
        out_shape = (
            jax.ShapeDtypeStruct((sz_b, len_q, rnn_unit), q.dtype),
            jax.ShapeDtypeStruct((n_head, sz_b, len_q, len_k), jnp.float32),
        )
        out_specs = (
            out_block,
            pl.BlockSpec((n_head, batch_tile, len_q, len_k),
                         lambda b: (0, b, 0, 0)),
        )
    else:
        out_shape = jax.ShapeDtypeStruct((sz_b, len_q, rnn_unit), q.dtype)
        out_specs = out_block

    results = pl.pallas_call(
        kernel,
        out_shape=out_shape,
        grid_spec=pltpu.PrefetchScalarGridSpec(
            num_scalar_prefetch=0,
            grid=grid,
            in_specs=in_specs,
            out_specs=out_specs,
        ),
        compiler_params=pltpu.CompilerParams(
            dimension_semantics=("parallel",)),   # batch steps are independent
    )(
        q, k, v,
        params["wq_t"], params["bq"],
        params["wk_t"], params["bk"],
        params["wv_t"], params["bv"],
        params["wfc_t"], params["bfc"],
        params["ln_gamma"], params["ln_beta"],
    )

    if return_attn:
        out, attn4 = results
        # (n_head, sz_b, lq, lk) -> (n_head*sz_b, lq, lk): matches torch's
        # permute(2,0,1,3).contiguous().view(-1, lq, lk) head-major ordering.
        attn = attn4.reshape(n_head * sz_b, len_q, len_k)
        return out, attn
    return results


def _reference(q, k, v, params, *, n_head, d_k, d_v):
    """Pure-JAX reference mirroring the PyTorch forward (dropout=identity)."""
    sz_b, len_q, rnn = q.shape
    _, len_k, _ = k.shape
    temperature = np.power(d_k, 0.5)
    Q = (q @ params["wq_t"] + params["bq"]).reshape(sz_b, len_q, n_head, d_k)
    K = (k @ params["wk_t"] + params["bk"]).reshape(sz_b, len_k, n_head, d_k)
    V = (v @ params["wv_t"] + params["bv"]).reshape(sz_b, len_k, n_head, d_v)
    Q = Q.transpose(2, 0, 1, 3).reshape(-1, len_q, d_k)
    K = K.transpose(2, 0, 1, 3).reshape(-1, len_k, d_k)
    V = V.transpose(2, 0, 1, 3).reshape(-1, len_k, d_v)
    s = jnp.einsum("bqd,bkd->bqk", Q, K) / temperature
    attn = jax.nn.softmax(s, axis=2)
    o = jnp.einsum("bqk,bkd->bqd", attn, V)
    o = o.reshape(n_head, sz_b, len_q, d_v).transpose(1, 2, 0, 3).reshape(sz_b, len_q, -1)
    o = o @ params["wfc_t"] + params["bfc"]
    o = o + q
    mean = jnp.mean(o, axis=-1, keepdims=True)
    var = jnp.mean((o - mean) ** 2, axis=-1, keepdims=True)
    o = (o - mean) / jnp.sqrt(var + 1e-5)
    o = o * params["ln_gamma"] + params["ln_beta"]
    return o, attn


def init_params(key, rnn_unit, n_head, d_k, d_v):
    ks = jax.random.split(key, 8)
    std_qk = np.sqrt(2.0 / (rnn_unit + d_k))
    std_v = np.sqrt(2.0 / (rnn_unit + d_v))
    xavier_fc = np.sqrt(2.0 / (n_head * d_v + rnn_unit))
    return {
        # stored pre-transposed: (in_features, out_features)
        "wq_t": (jax.random.normal(ks[0], (rnn_unit, n_head * d_k)) * std_qk).astype(jnp.float32),
        "wk_t": (jax.random.normal(ks[1], (rnn_unit, n_head * d_k)) * std_qk).astype(jnp.float32),
        "wv_t": (jax.random.normal(ks[2], (rnn_unit, n_head * d_v)) * std_v).astype(jnp.float32),
        "bq": (jax.random.normal(ks[3], (1, n_head * d_k)) * 0.01).astype(jnp.float32),
        "bk": (jax.random.normal(ks[4], (1, n_head * d_k)) * 0.01).astype(jnp.float32),
        "bv": (jax.random.normal(ks[5], (1, n_head * d_v)) * 0.01).astype(jnp.float32),
        "wfc_t": (jax.random.normal(ks[6], (n_head * d_v, rnn_unit)) * xavier_fc).astype(jnp.float32),
        "bfc": (jax.random.normal(ks[7], (1, rnn_unit)) * 0.01).astype(jnp.float32),
        "ln_gamma": jnp.ones((1, rnn_unit), jnp.float32),
        "ln_beta": jnp.zeros((1, rnn_unit), jnp.float32),
    }


if __name__ == "__main__":
    n_head, rnn_unit, d_k, d_v = 2, 32, 16, 16
    sz_b, seq_len = 2, 8

    key = jax.random.PRNGKey(0)
    kq, kk, kv, kp = jax.random.split(key, 4)
    q = jax.random.normal(kq, (sz_b, seq_len, rnn_unit), jnp.float32)
    k = jax.random.normal(kk, (sz_b, seq_len, rnn_unit), jnp.float32)
    v = jax.random.normal(kv, (sz_b, seq_len, rnn_unit), jnp.float32)
    params = init_params(kp, rnn_unit, n_head, d_k, d_v)

    out, attn = temporal_attention(q, k, v, params, n_head=n_head, d_k=d_k, d_v=d_v)
    out = jax.block_until_ready(out)
    attn = jax.block_until_ready(attn)

    # attn-free fast path (skips the only O(len^2) HBM writeback).
    out_only = jax.block_until_ready(
        temporal_attention(q, k, v, params, n_head=n_head, d_k=d_k, d_v=d_v,
                           return_attn=False))

    out_ref, attn_ref = _reference(q, k, v, params, n_head=n_head, d_k=d_k, d_v=d_v)
    np.testing.assert_allclose(np.asarray(out), np.asarray(out_ref), rtol=1e-4, atol=1e-4)
    np.testing.assert_allclose(np.asarray(attn), np.asarray(attn_ref), rtol=1e-4, atol=1e-4)
    np.testing.assert_allclose(np.asarray(out_only), np.asarray(out_ref), rtol=1e-4, atol=1e-4)

    print("KERNEL_OK")
</pallas_src>

<mosaic_0001>
module attributes {stable_mosaic.version = 11 : i64} {
  func.func @_temporal_attention_kernel(%arg0: i32, %arg1: memref<2x8x32xf32, #tpu.memory_space<vmem>>, %arg2: memref<2x8x32xf32, #tpu.memory_space<vmem>>, %arg3: memref<2x8x32xf32, #tpu.memory_space<vmem>>, %arg4: memref<32x32xf32, #tpu.memory_space<vmem>>, %arg5: memref<1x32xf32, #tpu.memory_space<vmem>>, %arg6: memref<32x32xf32, #tpu.memory_space<vmem>>, %arg7: memref<1x32xf32, #tpu.memory_space<vmem>>, %arg8: memref<32x32xf32, #tpu.memory_space<vmem>>, %arg9: memref<1x32xf32, #tpu.memory_space<vmem>>, %arg10: memref<32x32xf32, #tpu.memory_space<vmem>>, %arg11: memref<1x32xf32, #tpu.memory_space<vmem>>, %arg12: memref<1x32xf32, #tpu.memory_space<vmem>>, %arg13: memref<1x32xf32, #tpu.memory_space<vmem>>, %arg14: memref<2x8x32xf32, #tpu.memory_space<vmem>>, %arg15: memref<2x2x8x8xf32, #tpu.memory_space<vmem>>) attributes {dimension_semantics = [#tpu.dimension_semantics<parallel>], iteration_bounds = array<i64: 1>, scalar_prefetch = 0 : i64, scratch_operands = 0 : i64, tpu.core_type = #tpu.core_type<tc>, window_params = [{transform_indices = @transform_0, window_bounds = array<i64: 2, 8, 32>}, {transform_indices = @transform_1, window_bounds = array<i64: 2, 8, 32>}, {transform_indices = @transform_2, window_bounds = array<i64: 2, 8, 32>}, {pipeline_mode = #tpu.pipeline_mode<synchronous>, transform_indices = @transform_3, window_bounds = array<i64: 32, 32>}, {pipeline_mode = #tpu.pipeline_mode<synchronous>, transform_indices = @transform_4, window_bounds = array<i64: 1, 32>}, {pipeline_mode = #tpu.pipeline_mode<synchronous>, transform_indices = @transform_5, window_bounds = array<i64: 32, 32>}, {pipeline_mode = #tpu.pipeline_mode<synchronous>, transform_indices = @transform_6, window_bounds = array<i64: 1, 32>}, {pipeline_mode = #tpu.pipeline_mode<synchronous>, transform_indices = @transform_7, window_bounds = array<i64: 32, 32>}, {pipeline_mode = #tpu.pipeline_mode<synchronous>, transform_indices = @transform_8, window_bounds = array<i64: 1, 32>}, {pipeline_mode = #tpu.pipeline_mode<synchronous>, transform_indices = @transform_9, window_bounds = array<i64: 32, 32>}, {pipeline_mode = #tpu.pipeline_mode<synchronous>, transform_indices = @transform_10, window_bounds = array<i64: 1, 32>}, {pipeline_mode = #tpu.pipeline_mode<synchronous>, transform_indices = @transform_11, window_bounds = array<i64: 1, 32>}, {pipeline_mode = #tpu.pipeline_mode<synchronous>, transform_indices = @transform_12, window_bounds = array<i64: 1, 32>}, {transform_indices = @transform_13, window_bounds = array<i64: 2, 8, 32>}, {transform_indices = @transform_14, window_bounds = array<i64: 2, 2, 8, 8>}]} {
    %c0 = arith.constant 0 : index
    %c0_0 = arith.constant 0 : index
    %c0_1 = arith.constant 0 : index
    %0 = vector.load %arg1[%c0, %c0_0, %c0_1] : memref<2x8x32xf32, #tpu.memory_space<vmem>>, vector<2x8x32xf32>
    %1 = vector.shape_cast %0 : vector<2x8x32xf32> to vector<16x32xf32>
    %c0_2 = arith.constant 0 : index
    %c0_3 = arith.constant 0 : index
    %c0_4 = arith.constant 0 : index
    %2 = vector.load %arg2[%c0_2, %c0_3, %c0_4] : memref<2x8x32xf32, #tpu.memory_space<vmem>>, vector<2x8x32xf32>
    %3 = vector.shape_cast %2 : vector<2x8x32xf32> to vector<16x32xf32>
    %c0_5 = arith.constant 0 : index
    %c0_6 = arith.constant 0 : index
    %c0_7 = arith.constant 0 : index
    %4 = vector.load %arg3[%c0_5, %c0_6, %c0_7] : memref<2x8x32xf32, #tpu.memory_space<vmem>>, vector<2x8x32xf32>
    %5 = vector.shape_cast %4 : vector<2x8x32xf32> to vector<16x32xf32>
    %c0_8 = arith.constant 0 : index
    %c0_9 = arith.constant 0 : index
    %6 = vector.load %arg4[%c0_8, %c0_9] : memref<32x32xf32, #tpu.memory_space<vmem>>, vector<32x32xf32>
    %cst = arith.constant dense<0.000000e+00> : vector<16x32xf32>
    %7 = tpu.matmul %1, %6, %cst {dimension_numbers = #tpu.dot_dimension_numbers<[1], [0], [0], [1], [0, 0, 1, 1], [], []>} : vector<16x32xf32>, vector<32x32xf32>, vector<16x32xf32> -> vector<16x32xf32>
    %c0_10 = arith.constant 0 : index
    %c0_11 = arith.constant 0 : index
    %8 = vector.load %arg5[%c0_10, %c0_11] : memref<1x32xf32, #tpu.memory_space<vmem>>, vector<1x32xf32>
    %9 = vector.broadcast %8 : vector<1x32xf32> to vector<16x32xf32>
    %10 = arith.addf %7, %9 : vector<16x32xf32>
    %c0_12 = arith.constant 0 : index
    %c0_13 = arith.constant 0 : index
    %11 = vector.load %arg6[%c0_12, %c0_13] : memref<32x32xf32, #tpu.memory_space<vmem>>, vector<32x32xf32>
    %cst_14 = arith.constant dense<0.000000e+00> : vector<16x32xf32>
    %12 = tpu.matmul %3, %11, %cst_14 {dimension_numbers = #tpu.dot_dimension_numbers<[1], [0], [0], [1], [0, 0, 1, 1], [], []>} : vector<16x32xf32>, vector<32x32xf32>, vector<16x32xf32> -> vector<16x32xf32>
    %c0_15 = arith.constant 0 : index
    %c0_16 = arith.constant 0 : index
    %13 = vector.load %arg7[%c0_15, %c0_16] : memref<1x32xf32, #tpu.memory_space<vmem>>, vector<1x32xf32>
    %14 = vector.broadcast %13 : vector<1x32xf32> to vector<16x32xf32>
    %15 = arith.addf %12, %14 : vector<16x32xf32>
    %c0_17 = arith.constant 0 : index
    %c0_18 = arith.constant 0 : index
    %16 = vector.load %arg8[%c0_17, %c0_18] : memref<32x32xf32, #tpu.memory_space<vmem>>, vector<32x32xf32>
    %cst_19 = arith.constant dense<0.000000e+00> : vector<16x32xf32>
    %17 = tpu.matmul %5, %16, %cst_19 {dimension_numbers = #tpu.dot_dimension_numbers<[1], [0], [0], [1], [0, 0, 1, 1], [], []>} : vector<16x32xf32>, vector<32x32xf32>, vector<16x32xf32> -> vector<16x32xf32>
    %c0_20 = arith.constant 0 : index
    %c0_21 = arith.constant 0 : index
    %18 = vector.load %arg9[%c0_20, %c0_21] : memref<1x32xf32, #tpu.memory_space<vmem>>, vector<1x32xf32>
    %19 = vector.broadcast %18 : vector<1x32xf32> to vector<16x32xf32>
    %20 = arith.addf %17, %19 : vector<16x32xf32>
    %cst_22 = arith.constant 0.000000e+00 : f32
    %21 = vector.broadcast %cst_22 : f32 to vector<16x32xf32>
    %22 = vector.extract_strided_slice %10 {offsets = [0, 0], sizes = [16, 16], strides = [1, 1]} : vector<16x32xf32> to vector<16x16xf32>
    %23 = vector.shape_cast %22 : vector<16x16xf32> to vector<2x8x16xf32>
    %24 = vector.extract_strided_slice %15 {offsets = [0, 0], sizes = [16, 16], strides = [1, 1]} : vector<16x32xf32> to vector<16x16xf32>
    %25 = vector.shape_cast %24 : vector<16x16xf32> to vector<2x8x16xf32>
    %26 = vector.extract_strided_slice %20 {offsets = [0, 0], sizes = [16, 16], strides = [1, 1]} : vector<16x32xf32> to vector<16x16xf32>
    %27 = vector.shape_cast %26 : vector<16x16xf32> to vector<2x8x16xf32>
    "tpu.trace_start"() <{level = 10 : i32, message = "bqd,bkd->bqk"}> : () -> ()
    %cst_23 = arith.constant dense<0.000000e+00> : vector<2x8x8xf32>
    %28 = tpu.matmul %23, %25, %cst_23 {dimension_numbers = #tpu.dot_dimension_numbers<[2], [2], [1], [1], [0, 0, 0, 1, 1, 1], [0], [0]>} : vector<2x8x16xf32>, vector<2x8x16xf32>, vector<2x8x8xf32> -> vector<2x8x8xf32>
    "tpu.trace_stop"() : () -> ()
    %cst_24 = arith.constant 2.500000e-01 : f32
    %29 = vector.broadcast %cst_24 : f32 to vector<2x8x8xf32>
    %30 = arith.mulf %28, %29 : vector<2x8x8xf32>
    %cst_25 = arith.constant dense<0xFF800000> : vector<2x8xf32>
    %31 = vector.multi_reduction <maximumf>, %30, %cst_25 [2] : vector<2x8x8xf32> to vector<2x8xf32>
    %32 = vector.shape_cast %31 : vector<2x8xf32> to vector<2x8x1xf32>
    %33 = vector.broadcast %32 : vector<2x8x1xf32> to vector<2x8x8xf32>
    %34 = arith.subf %30, %33 : vector<2x8x8xf32>
    %35 = math.exp %34 : vector<2x8x8xf32>
    %cst_26 = arith.constant dense<0.000000e+00> : vector<2x8xf32>
    %36 = vector.multi_reduction <add>, %35, %cst_26 [2] : vector<2x8x8xf32> to vector<2x8xf32>
    %37 = vector.shape_cast %36 : vector<2x8xf32> to vector<2x8x1xf32>
    %38 = tpu.reciprocal %37 : vector<2x8x1xf32> -> vector<2x8x1xf32>
    %39 = vector.broadcast %38 : vector<2x8x1xf32> to vector<2x8x8xf32>
    %40 = arith.mulf %35, %39 : vector<2x8x8xf32>
    %c0_27 = arith.constant 0 : index
    %c0_28 = arith.constant 0 : index
    %c0_29 = arith.constant 0 : index
    %c0_30 = arith.constant 0 : index
    %41 = vector.load %arg15[%c0_27, %c0_28, %c0_29, %c0_30] : memref<2x2x8x8xf32, #tpu.memory_space<vmem>>, vector<1x2x8x8xf32>
    %42 = vector.shape_cast %41 : vector<1x2x8x8xf32> to vector<2x8x8xf32>
    %43 = vector.shape_cast %40 : vector<2x8x8xf32> to vector<1x2x8x8xf32>
    tpu.vector_store %arg15[%c0_27, %c0_28, %c0_29, %c0_30], %43 {strides = array<i32>} : memref<2x2x8x8xf32, #tpu.memory_space<vmem>>, vector<1x2x8x8xf32>,
    "tpu.trace_start"() <{level = 10 : i32, message = "bqk,bkd->bqd"}> : () -> ()
    %cst_31 = arith.constant dense<0.000000e+00> : vector<2x8x16xf32>
    %44 = tpu.matmul %40, %27, %cst_31 {dimension_numbers = #tpu.dot_dimension_numbers<[2], [1], [1], [2], [0, 0, 0, 1, 1, 2], [0], [0]>} : vector<2x8x8xf32>, vector<2x8x16xf32>, vector<2x8x16xf32> -> vector<2x8x16xf32>
    "tpu.trace_stop"() : () -> ()
    %45 = vector.shape_cast %44 : vector<2x8x16xf32> to vector<16x16xf32>
    %c0_32 = arith.constant 0 : index
    %c0_33 = arith.constant 0 : index
    %46 = vector.load %arg10[%c0_32, %c0_33] : memref<32x32xf32, #tpu.memory_space<vmem>>, vector<16x32xf32>
    %cst_34 = arith.constant dense<0.000000e+00> : vector<16x32xf32>
    %47 = tpu.matmul %45, %46, %cst_34 {dimension_numbers = #tpu.dot_dimension_numbers<[1], [0], [0], [1], [0, 0, 1, 1], [], []>} : vector<16x16xf32>, vector<16x32xf32>, vector<16x32xf32> -> vector<16x32xf32>
    %48 = arith.addf %21, %47 : vector<16x32xf32>
    %49 = vector.extract_strided_slice %10 {offsets = [0, 16], sizes = [16, 16], strides = [1, 1]} : vector<16x32xf32> to vector<16x16xf32>
    %50 = vector.shape_cast %49 : vector<16x16xf32> to vector<2x8x16xf32>
    %51 = vector.extract_strided_slice %15 {offsets = [0, 16], sizes = [16, 16], strides = [1, 1]} : vector<16x32xf32> to vector<16x16xf32>
    %52 = vector.shape_cast %51 : vector<16x16xf32> to vector<2x8x16xf32>
    %53 = vector.extract_strided_slice %20 {offsets = [0, 16], sizes = [16, 16], strides = [1, 1]} : vector<16x32xf32> to vector<16x16xf32>
    %54 = vector.shape_cast %53 : vector<16x16xf32> to vector<2x8x16xf32>
    "tpu.trace_start"() <{level = 10 : i32, message = "bqd,bkd->bqk"}> : () -> ()
    %cst_35 = arith.constant dense<0.000000e+00> : vector<2x8x8xf32>
    %55 = tpu.matmul %50, %52, %cst_35 {dimension_numbers = #tpu.dot_dimension_numbers<[2], [2], [1], [1], [0, 0, 0, 1, 1, 1], [0], [0]>} : vector<2x8x16xf32>, vector<2x8x16xf32>, vector<2x8x8xf32> -> vector<2x8x8xf32>
    "tpu.trace_stop"() : () -> ()
    %cst_36 = arith.constant 2.500000e-01 : f32
    %56 = vector.broadcast %cst_36 : f32 to vector<2x8x8xf32>
    %57 = arith.mulf %55, %56 : vector<2x8x8xf32>
    %cst_37 = arith.constant dense<0xFF800000> : vector<2x8xf32>
    %58 = vector.multi_reduction <maximumf>, %57, %cst_37 [2] : vector<2x8x8xf32> to vector<2x8xf32>
    %59 = vector.shape_cast %58 : vector<2x8xf32> to vector<2x8x1xf32>
    %60 = vector.broadcast %59 : vector<2x8x1xf32> to vector<2x8x8xf32>
    %61 = arith.subf %57, %60 : vector<2x8x8xf32>
    %62 = math.exp %61 : vector<2x8x8xf32>
    %cst_38 = arith.constant dense<0.000000e+00> : vector<2x8xf32>
    %63 = vector.multi_reduction <add>, %62, %cst_38 [2] : vector<2x8x8xf32> to vector<2x8xf32>
    %64 = vector.shape_cast %63 : vector<2x8xf32> to vector<2x8x1xf32>
    %65 = tpu.reciprocal %64 : vector<2x8x1xf32> -> vector<2x8x1xf32>
    %66 = vector.broadcast %65 : vector<2x8x1xf32> to vector<2x8x8xf32>
    %67 = arith.mulf %62, %66 : vector<2x8x8xf32>
    %c1 = arith.constant 1 : index
    %c0_39 = arith.constant 0 : index
    %c0_40 = arith.constant 0 : index
    %c0_41 = arith.constant 0 : index
    %68 = vector.load %arg15[%c1, %c0_39, %c0_40, %c0_41] : memref<2x2x8x8xf32, #tpu.memory_space<vmem>>, vector<1x2x8x8xf32>
    %69 = vector.shape_cast %68 : vector<1x2x8x8xf32> to vector<2x8x8xf32>
    %70 = vector.shape_cast %67 : vector<2x8x8xf32> to vector<1x2x8x8xf32>
    tpu.vector_store %arg15[%c1, %c0_39, %c0_40, %c0_41], %70 {strides = array<i32>} : memref<2x2x8x8xf32, #tpu.memory_space<vmem>>, vector<1x2x8x8xf32>,
    "tpu.trace_start"() <{level = 10 : i32, message = "bqk,bkd->bqd"}> : () -> ()
    %cst_42 = arith.constant dense<0.000000e+00> : vector<2x8x16xf32>
    %71 = tpu.matmul %67, %54, %cst_42 {dimension_numbers = #tpu.dot_dimension_numbers<[2], [1], [1], [2], [0, 0, 0, 1, 1, 2], [0], [0]>} : vector<2x8x8xf32>, vector<2x8x16xf32>, vector<2x8x16xf32> -> vector<2x8x16xf32>
    "tpu.trace_stop"() : () -> ()
    %72 = vector.shape_cast %71 : vector<2x8x16xf32> to vector<16x16xf32>
    %c16 = arith.constant 16 : index
    %c0_43 = arith.constant 0 : index
    %73 = vector.load %arg10[%c16, %c0_43] : memref<32x32xf32, #tpu.memory_space<vmem>>, vector<16x32xf32>
    %cst_44 = arith.constant dense<0.000000e+00> : vector<16x32xf32>
    %74 = tpu.matmul %72, %73, %cst_44 {dimension_numbers = #tpu.dot_dimension_numbers<[1], [0], [0], [1], [0, 0, 1, 1], [], []>} : vector<16x16xf32>, vector<16x32xf32>, vector<16x32xf32> -> vector<16x32xf32>
    %75 = arith.addf %48, %74 : vector<16x32xf32>
    %c0_45 = arith.constant 0 : index
    %c0_46 = arith.constant 0 : index
    %76 = vector.load %arg11[%c0_45, %c0_46] : memref<1x32xf32, #tpu.memory_space<vmem>>, vector<1x32xf32>
    %77 = vector.broadcast %76 : vector<1x32xf32> to vector<16x32xf32>
    %78 = arith.addf %75, %77 : vector<16x32xf32>
    %79 = arith.addf %78, %1 : vector<16x32xf32>
    %cst_47 = arith.constant dense<0.000000e+00> : vector<16xf32>
    %80 = vector.multi_reduction <add>, %79, %cst_47 [1] : vector<16x32xf32> to vector<16xf32>
    %81 = vector.shape_cast %80 : vector<16xf32> to vector<16x1xf32>
    %cst_48 = arith.constant 3.125000e-02 : f32
    %82 = vector.broadcast %cst_48 : f32 to vector<16x1xf32>
    %83 = arith.mulf %81, %82 : vector<16x1xf32>
    %84 = vector.broadcast %83 : vector<16x1xf32> to vector<16x32xf32>
    %85 = arith.subf %79, %84 : vector<16x32xf32>
    %86 = arith.mulf %85, %85 : vector<16x32xf32>
    %cst_49 = arith.constant dense<0.000000e+00> : vector<16xf32>
    %87 = vector.multi_reduction <add>, %86, %cst_49 [1] : vector<16x32xf32> to vector<16xf32>
    %88 = vector.shape_cast %87 : vector<16xf32> to vector<16x1xf32>
    %cst_50 = arith.constant 3.125000e-02 : f32
    %89 = vector.broadcast %cst_50 : f32 to vector<16x1xf32>
    %90 = arith.mulf %88, %89 : vector<16x1xf32>
    %cst_51 = arith.constant 9.99999974E-6 : f32
    %91 = vector.broadcast %cst_51 : f32 to vector<16x1xf32>
    %92 = arith.addf %90, %91 : vector<16x1xf32>
    %93 = math.rsqrt %92 : vector<16x1xf32>
    %94 = vector.broadcast %93 : vector<16x1xf32> to vector<16x32xf32>
    %95 = arith.mulf %85, %94 : vector<16x32xf32>
    %c0_52 = arith.constant 0 : index
    %c0_53 = arith.constant 0 : index
    %96 = vector.load %arg12[%c0_52, %c0_53] : memref<1x32xf32, #tpu.memory_space<vmem>>, vector<1x32xf32>
    %97 = vector.broadcast %96 : vector<1x32xf32> to vector<16x32xf32>
    %98 = arith.mulf %95, %97 : vector<16x32xf32>
    %c0_54 = arith.constant 0 : index
    %c0_55 = arith.constant 0 : index
    %99 = vector.load %arg13[%c0_54, %c0_55] : memref<1x32xf32, #tpu.memory_space<vmem>>, vector<1x32xf32>
    %100 = vector.broadcast %99 : vector<1x32xf32> to vector<16x32xf32>
    %101 = arith.addf %98, %100 : vector<16x32xf32>
    %102 = vector.shape_cast %101 : vector<16x32xf32> to vector<2x8x32xf32>
    %c0_56 = arith.constant 0 : index
    %c0_57 = arith.constant 0 : index
    %c0_58 = arith.constant 0 : index
    %103 = vector.load %arg14[%c0_56, %c0_57, %c0_58] : memref<2x8x32xf32, #tpu.memory_space<vmem>>, vector<2x8x32xf32>
    tpu.vector_store %arg14[%c0_56, %c0_57, %c0_58], %102 {strides = array<i32>} : memref<2x8x32xf32, #tpu.memory_space<vmem>>, vector<2x8x32xf32>,
    return
  }
  func.func @transform_0(%arg0: i32) -> (i32, i32, i32) {
    %c0_i32 = arith.constant 0 : i32
    %c0_i32_0 = arith.constant 0 : i32
    %c0_i32_1 = arith.constant 0 : i32
    return %arg0, %c0_i32, %c0_i32_0 : i32, i32, i32
  }
  func.func @transform_1(%arg0: i32) -> (i32, i32, i32) {
    %c0_i32 = arith.constant 0 : i32
    %c0_i32_0 = arith.constant 0 : i32
    %c0_i32_1 = arith.constant 0 : i32
    return %arg0, %c0_i32, %c0_i32_0 : i32, i32, i32
  }
  func.func @transform_2(%arg0: i32) -> (i32, i32, i32) {
    %c0_i32 = arith.constant 0 : i32
    %c0_i32_0 = arith.constant 0 : i32
    %c0_i32_1 = arith.constant 0 : i32
    return %arg0, %c0_i32, %c0_i32_0 : i32, i32, i32
  }
  func.func @transform_3(%arg0: i32) -> (i32, i32) {
    %c0_i32 = arith.constant 0 : i32
    %c0_i32_0 = arith.constant 0 : i32
    %c0_i32_1 = arith.constant 0 : i32
    return %c0_i32, %c0_i32_0 : i32, i32
  }
  func.func @transform_4(%arg0: i32) -> (i32, i32) {
    %c0_i32 = arith.constant 0 : i32
    %c0_i32_0 = arith.constant 0 : i32
    %c0_i32_1 = arith.constant 0 : i32
    return %c0_i32, %c0_i32_0 : i32, i32
  }
  func.func @transform_5(%arg0: i32) -> (i32, i32) {
    %c0_i32 = arith.constant 0 : i32
    %c0_i32_0 = arith.constant 0 : i32
    %c0_i32_1 = arith.constant 0 : i32
    return %c0_i32, %c0_i32_0 : i32, i32
  }
  func.func @transform_6(%arg0: i32) -> (i32, i32) {
    %c0_i32 = arith.constant 0 : i32
    %c0_i32_0 = arith.constant 0 : i32
    %c0_i32_1 = arith.constant 0 : i32
    return %c0_i32, %c0_i32_0 : i32, i32
  }
  func.func @transform_7(%arg0: i32) -> (i32, i32) {
    %c0_i32 = arith.constant 0 : i32
    %c0_i32_0 = arith.constant 0 : i32
    %c0_i32_1 = arith.constant 0 : i32
    return %c0_i32, %c0_i32_0 : i32, i32
  }
  func.func @transform_8(%arg0: i32) -> (i32, i32) {
    %c0_i32 = arith.constant 0 : i32
    %c0_i32_0 = arith.constant 0 : i32
    %c0_i32_1 = arith.constant 0 : i32
    return %c0_i32, %c0_i32_0 : i32, i32
  }
  func.func @transform_9(%arg0: i32) -> (i32, i32) {
    %c0_i32 = arith.constant 0 : i32
    %c0_i32_0 = arith.constant 0 : i32
    %c0_i32_1 = arith.constant 0 : i32
    return %c0_i32, %c0_i32_0 : i32, i32
  }
  func.func @transform_10(%arg0: i32) -> (i32, i32) {
    %c0_i32 = arith.constant 0 : i32
    %c0_i32_0 = arith.constant 0 : i32
    %c0_i32_1 = arith.constant 0 : i32
    return %c0_i32, %c0_i32_0 : i32, i32
  }
  func.func @transform_11(%arg0: i32) -> (i32, i32) {
    %c0_i32 = arith.constant 0 : i32
    %c0_i32_0 = arith.constant 0 : i32
    %c0_i32_1 = arith.constant 0 : i32
    return %c0_i32, %c0_i32_0 : i32, i32
  }
  func.func @transform_12(%arg0: i32) -> (i32, i32) {
    %c0_i32 = arith.constant 0 : i32
    %c0_i32_0 = arith.constant 0 : i32
    %c0_i32_1 = arith.constant 0 : i32
    return %c0_i32, %c0_i32_0 : i32, i32
  }
  func.func @transform_13(%arg0: i32) -> (i32, i32, i32) {
    %c0_i32 = arith.constant 0 : i32
    %c0_i32_0 = arith.constant 0 : i32
    %c0_i32_1 = arith.constant 0 : i32
    return %arg0, %c0_i32, %c0_i32_0 : i32, i32, i32
  }
  func.func @transform_14(%arg0: i32) -> (i32, i32, i32, i32) {
    %c0_i32 = arith.constant 0 : i32
    %c0_i32_0 = arith.constant 0 : i32
    %c0_i32_1 = arith.constant 0 : i32
    %c0_i32_2 = arith.constant 0 : i32
    return %c0_i32, %arg0, %c0_i32_0, %c0_i32_1 : i32, i32, i32, i32
  }
}

</mosaic_0001>

<llo_original>
// kernel: tpu_custom_call.1
$region0: #{tpu_custom_call.1}
  #allocation0 [shape = 'u32[]', space=smem, size = 0x4, offset = 0x4, fixed_abs, tag = 'smem constant byte address 0x4 - core index']
  #allocation1 [shape = 'u32[144,128]{1,0:T(1,128)}', space=vmem, size = 0x12000, scoped, tag = 'internal scratch']
  %s0 = inlined_call_operand.hbm [shape: f32[2,8,32], index: 0, kind: input, shape index: {}]
  %s1 = inlined_call_operand.hbm [shape: f32[2,8,32], index: 1, kind: input, shape index: {}]
  %s2 = inlined_call_operand.hbm [shape: f32[2,8,32], index: 2, kind: input, shape index: {}]
  %s3 = inlined_call_operand.hbm [shape: f32[32,32], index: 3, kind: input, shape index: {}]
  %s4 = inlined_call_operand.vmem [shape: f32[1,32], index: 4, kind: input, shape index: {}]
  %s5 = inlined_call_operand.hbm [shape: f32[32,32], index: 5, kind: input, shape index: {}]
  %s6 = inlined_call_operand.vmem [shape: f32[1,32], index: 6, kind: input, shape index: {}]
  %s7 = inlined_call_operand.hbm [shape: f32[32,32], index: 7, kind: input, shape index: {}]
  %s8 = inlined_call_operand.hbm [shape: f32[1,32], index: 8, kind: input, shape index: {}]
  %s9 = inlined_call_operand.vmem [shape: f32[32,32], index: 9, kind: input, shape index: {}]
  %s10 = inlined_call_operand.vmem [shape: f32[1,32], index: 10, kind: input, shape index: {}]
  %s11 = inlined_call_operand.vmem [shape: f32[1,32], index: 11, kind: input, shape index: {}]
  %s12 = inlined_call_operand.vmem [shape: f32[1,32], index: 12, kind: input, shape index: {}]
  %s13 = inlined_call_operand.hbm [shape: f32[2,8,32], index: 13, kind: output, shape index: {0}]
  %s14 = inlined_call_operand.hbm [shape: f32[2,2,8,8], index: 14, kind: output, shape index: {1}]
  %15 = xla_tuple %s13, %s14
  %s16 = sld [smem:[#allocation0]]
  $region98: #{tpu_custom_call.1} parent=0
    _
  %s18 = ssub.s32 1, %s16
  %s19 = scalar_select 0, %s18, %s16
  $region1: #{tpu_custom_call.1} parent=0
    #allocation2 [shape = 'u8[8192]{0}', space=vmem, size = 0x2000, scoped, tag = 'input window, operand 0, single buffered']
    #allocation3 [shape = 's32[1]{0}', space=sflag, size = 0x4, scoped, tag = 'scoped memory for tpu_custom_call.1']
    #allocation4 [shape = 's32[1]{0}', space=sflag, size = 0x4, scoped, tag = 'scoped memory for tpu_custom_call.1']
    #allocation5 [shape = 'u8[8192]{0}', space=vmem, size = 0x2000, scoped, tag = 'input window, operand 1, single buffered']
    #allocation6 [shape = 's32[1]{0}', space=sflag, size = 0x4, scoped, tag = 'scoped memory for tpu_custom_call.1']
    #allocation7 [shape = 'u8[8192]{0}', space=vmem, size = 0x2000, scoped, tag = 'input window, operand 2, single buffered']
    #allocation8 [shape = 'u8[16384]{0}', space=vmem, size = 0x4000, scoped, tag = 'input window, operand 3, single buffered']
    #allocation9 [shape = 's32[1]{0}', space=sflag, size = 0x4, scoped, tag = 'scoped memory for tpu_custom_call.1']
    #allocation10 [shape = 'u8[16384]{0}', space=vmem, size = 0x4000, scoped, tag = 'input window, operand 5, single buffered']
    #allocation11 [shape = 'u8[16384]{0}', space=vmem, size = 0x4000, scoped, tag = 'input window, operand 7, single buffered']
    #allocation12 [shape = 's32[1]{0}', space=sflag, size = 0x4, scoped, tag = 'scoped memory for tpu_custom_call.1']
    #allocation13 [shape = 'u8[512]{0}', space=vmem, size = 0x400, scoped, tag = 'input window, operand 8, single buffered']
    #allocation14 [shape = 'u8[8192]{0}', space=vmem, size = 0x2000, scoped, tag = 'output window, operand 0, single buffered']
    #allocation15 [shape = 'u8[16384]{0}', space=vmem, size = 0x4000, scoped, tag = 'output window, operand 1, single buffered']
    #allocation16 [shape = 's32[1]{0}', space=sflag, size = 0x4, scoped, tag = 'scoped memory for tpu_custom_call.1']
    %20 = vsyncpa [#allocation3], 0
    %21 = vsyncpa [#allocation6], 0
    %22 = vsyncpa [#allocation9], 0
    %23 = vsyncpa [#allocation12], 0
    %24 = vsyncpa [#allocation4], 0
    %25 = vsyncpa [#allocation16], 0
    // Predicated region
    $region2: #{tpu_custom_call.1} parent=1 // pred_check
      _
    $region3: #{tpu_custom_call.1} parent=1 // pred_check_branch
      %27 = sbr.rel (0) target = $region5
    $region4: #{tpu_custom_call.1} parent=1 // pred_region
      %s29 = ssub.s32 256, 256
      %30 = vsyncadd [#allocation3], %s29
      %s31 = sshll.u32 [#allocation2], 4
      %s32 = int_to_ptr.vmem [resolvable:$true] %s31
      %37 = dma.hbm_to_vmem [thread:$0]  %s0, 256, %s32, [#allocation3], 128, 128, 8
    $region5: #{tpu_custom_call.1} parent=1 // pred_fallthru
      _
    // Predicated region
    $region6: #{tpu_custom_call.1} parent=1 // pred_check
      _
    $region7: #{tpu_custom_call.1} parent=1 // pred_check_branch
      %39 = sbr.rel (0) target = $region9
    $region8: #{tpu_custom_call.1} parent=1 // pred_region
      %s41 = ssub.s32 256, 256
      %42 = vsyncadd [#allocation6], %s41
      %s43 = sshll.u32 [#allocation5], 4
      %s44 = int_to_ptr.vmem [resolvable:$true] %s43
      %49 = dma.hbm_to_vmem [thread:$0]  %s1, 256, %s44, [#allocation6], 128, 128, 8
    $region9: #{tpu_custom_call.1} parent=1 // pred_fallthru
      _
    // Predicated region
    $region10: #{tpu_custom_call.1} parent=1 // pred_check
      _
    $region11: #{tpu_custom_call.1} parent=1 // pred_check_branch
      %51 = sbr.rel (0) target = $region13
    $region12: #{tpu_custom_call.1} parent=1 // pred_region
      %s53 = ssub.s32 256, 256
      %54 = vsyncadd [#allocation6], %s53
      %s55 = sshll.u32 [#allocation7], 4
      %s56 = int_to_ptr.vmem [resolvable:$true] %s55
      %61 = dma.hbm_to_vmem [thread:$0]  %s2, 256, %s56, [#allocation6], 128, 128, 8
    $region13: #{tpu_custom_call.1} parent=1 // pred_fallthru
      _
    // Predicated region
    $region14: #{tpu_custom_call.1} parent=1 // pred_check
      _
    $region15: #{tpu_custom_call.1} parent=1 // pred_check_branch
      %63 = sbr.rel (0) target = $region17
    $region16: #{tpu_custom_call.1} parent=1 // pred_region
      %s65 = ssub.s32 512, 512
      %66 = vsyncadd [#allocation9], %s65
      %s67 = sshll.u32 [#allocation8], 4
      %s68 = int_to_ptr.vmem [resolvable:$true] %s67
      %73 = dma.hbm_to_vmem [thread:$0]  %s3, 512, %s68, [#allocation9], 128, 128, 8
    $region17: #{tpu_custom_call.1} parent=1 // pred_fallthru
      _
    // Predicated region
    $region18: #{tpu_custom_call.1} parent=1 // pred_check
      _
    $region19: #{tpu_custom_call.1} parent=1 // pred_check_branch
      %75 = sbr.rel (0) target = $region21
    $region20: #{tpu_custom_call.1} parent=1 // pred_region
      _
    $region21: #{tpu_custom_call.1} parent=1 // pred_fallthru
      _
    // Predicated region
    $region22: #{tpu_custom_call.1} parent=1 // pred_check
      _
    $region23: #{tpu_custom_call.1} parent=1 // pred_check_branch
      %77 = sbr.rel (0) target = $region25
    $region24: #{tpu_custom_call.1} parent=1 // pred_region
      %s79 = ssub.s32 512, 512
      %80 = vsyncadd [#allocation9], %s79
      %s81 = sshll.u32 [#allocation10], 4
      %s82 = int_to_ptr.vmem [resolvable:$true] %s81
      %87 = dma.hbm_to_vmem [thread:$0]  %s5, 512, %s82, [#allocation9], 128, 128, 8
    $region25: #{tpu_custom_call.1} parent=1 // pred_fallthru
      _
    // Predicated region
    $region26: #{tpu_custom_call.1} parent=1 // pred_check
      _
    $region27: #{tpu_custom_call.1} parent=1 // pred_check_branch
      %89 = sbr.rel (0) target = $region29
    $region28: #{tpu_custom_call.1} parent=1 // pred_region
      _
    $region29: #{tpu_custom_call.1} parent=1 // pred_fallthru
      _
    // Predicated region
    $region30: #{tpu_custom_call.1} parent=1 // pred_check
      _
    $region31: #{tpu_custom_call.1} parent=1 // pred_check_branch
      %91 = sbr.rel (0) target = $region33
    $region32: #{tpu_custom_call.1} parent=1 // pred_region
      %s93 = ssub.s32 512, 512
      %94 = vsyncadd [#allocation12], %s93
      %s95 = sshll.u32 [#allocation11], 4
      %s96 = int_to_ptr.vmem [resolvable:$true] %s95
      %101 = dma.hbm_to_vmem [thread:$0]  %s7, 512, %s96, [#allocation12], 128, 128, 8
    $region33: #{tpu_custom_call.1} parent=1 // pred_fallthru
      _
    // Predicated region
    $region34: #{tpu_custom_call.1} parent=1 // pred_check
      _
    $region35: #{tpu_custom_call.1} parent=1 // pred_check_branch
      %103 = sbr.rel (0) target = $region37
    $region36: #{tpu_custom_call.1} parent=1 // pred_region
      %s105 = ssub.s32 16, 16
      %106 = vsyncadd [#allocation12], %s105
      %s108 = sshll.u32 [#allocation13], 4
      %s109 = int_to_ptr.vmem [resolvable:$true] %s108
      %111 = dma.hbm_to_vmem [thread:$0]  %s8, 16, %s109, [#allocation12]
    $region37: #{tpu_custom_call.1} parent=1 // pred_fallthru
      _
    // Predicated region
    $region38: #{tpu_custom_call.1} parent=1 // pred_check
      _
    $region39: #{tpu_custom_call.1} parent=1 // pred_check_branch
      %113 = sbr.rel (0) target = $region41
    $region40: #{tpu_custom_call.1} parent=1 // pred_region
      _
    $region41: #{tpu_custom_call.1} parent=1 // pred_fallthru
      _
    // Predicated region
    $region42: #{tpu_custom_call.1} parent=1 // pred_check
      _
    $region43: #{tpu_custom_call.1} parent=1 // pred_check_branch
      %115 = sbr.rel (0) target = $region45
    $region44: #{tpu_custom_call.1} parent=1 // pred_region
      _
    $region45: #{tpu_custom_call.1} parent=1 // pred_fallthru
      _
    // Predicated region
    $region46: #{tpu_custom_call.1} parent=1 // pred_check
      _
    $region47: #{tpu_custom_call.1} parent=1 // pred_check_branch
      %117 = sbr.rel (0) target = $region49
    $region48: #{tpu_custom_call.1} parent=1 // pred_region
      _
    $region49: #{tpu_custom_call.1} parent=1 // pred_fallthru
      _
    // Predicated region
    $region50: #{tpu_custom_call.1} parent=1 // pred_check
      _
    $region51: #{tpu_custom_call.1} parent=1 // pred_check_branch
      %119 = sbr.rel (0) target = $region53
    $region52: #{tpu_custom_call.1} parent=1 // pred_region
      _
    $region53: #{tpu_custom_call.1} parent=1 // pred_fallthru
      _
    // Predicated region
    $region54: #{tpu_custom_call.1} parent=1 // pred_check
      _
    $region55: #{tpu_custom_call.1} parent=1 // pred_check_branch
      %121 = sbr.rel (0) target = $region57
    $region56: #{tpu_custom_call.1} parent=1 // pred_region
      %122 = dma.done [#allocation3], 256
    $region57: #{tpu_custom_call.1} parent=1 // pred_fallthru
      _
    // Predicated region
    $region58: #{tpu_custom_call.1} parent=1 // pred_check
      _
    $region59: #{tpu_custom_call.1} parent=1 // pred_check_branch
      %124 = sbr.rel (0) target = $region61
    $region60: #{tpu_custom_call.1} parent=1 // pred_region
      %125 = dma.done [#allocation6], 256
    $region61: #{tpu_custom_call.1} parent=1 // pred_fallthru
      _
    // Predicated region
    $region62: #{tpu_custom_call.1} parent=1 // pred_check
      _
    $region63: #{tpu_custom_call.1} parent=1 // pred_check_branch
      %127 = sbr.rel (0) target = $region65
    $region64: #{tpu_custom_call.1} parent=1 // pred_region
      %128 = dma.done [#allocation6], 256
    $region65: #{tpu_custom_call.1} parent=1 // pred_fallthru
      _
    // Predicated region
    $region66: #{tpu_custom_call.1} parent=1 // pred_check
      _
    $region67: #{tpu_custom_call.1} parent=1 // pred_check_branch
      %130 = sbr.rel (0) target = $region69
    $region68: #{tpu_custom_call.1} parent=1 // pred_region
      %131 = dma.done [#allocation9], 512
    $region69: #{tpu_custom_call.1} parent=1 // pred_fallthru
      _
    // Predicated region
    $region70: #{tpu_custom_call.1} parent=1 // pred_check
      _
    $region71: #{tpu_custom_call.1} parent=1 // pred_check_branch
      %133 = sbr.rel (0) target = $region73
    $region72: #{tpu_custom_call.1} parent=1 // pred_region
      %134 = dma.done [#allocation9], 512
    $region73: #{tpu_custom_call.1} parent=1 // pred_fallthru
      _
    // Predicated region
    $region74: #{tpu_custom_call.1} parent=1 // pred_check
      _
    $region75: #{tpu_custom_call.1} parent=1 // pred_check_branch
      %136 = sbr.rel (0) target = $region77
    $region76: #{tpu_custom_call.1} parent=1 // pred_region
      %137 = dma.done [#allocation12], 512
    $region77: #{tpu_custom_call.1} parent=1 // pred_fallthru
      _
    // Predicated region
    $region78: #{tpu_custom_call.1} parent=1 // pred_check
      _
    $region79: #{tpu_custom_call.1} parent=1 // pred_check_branch
      %139 = sbr.rel (0) target = $region81
    $region80: #{tpu_custom_call.1} parent=1 // pred_region
      %140 = dma.done [#allocation12], 16
    $region81: #{tpu_custom_call.1} parent=1 // pred_fallthru
      _
    %v141 = vld [vmem:[#allocation2] sm:$0xff]
    %v142 = vld [vmem:[#allocation2 + $0x8] sm:$0xff]
    %v143 = vld [vmem:[#allocation5] sm:$0xff]
    %v144 = vld [vmem:[#allocation5 + $0x8] sm:$0xff]
    %v145 = vld [vmem:[#allocation7] sm:$0xff]
    %v146 = vld [vmem:[#allocation7 + $0x8] sm:$0xff]
    %v147 = vld [vmem:[#allocation8] sm:$0xff]
    %v148 = vld [vmem:[#allocation8 + $0x8] sm:$0xff]
    %v149 = vld [vmem:[#allocation8 + $0x10] sm:$0xff]
    %v150 = vld [vmem:[#allocation8 + $0x18] sm:$0xff]
    %v151 = vld [vmem:[%s4] sm:$0x1]
    %v153 = vlaneseq
    %v154 = vshrl.u32 %v153, 7
    %v155 = vsub.s32 0, %v154
    %v156 = vrot.slane %v151, %v155
    %vm158 = vcmask 261120
    %v160 = vsel %vm158, %v141, 0
    %v163 = vsel %vm158, %v142, 0
    %165 = vmatprep.subr.mxu0 0.0
    %166 = vmatpush1.msra.mxu0 %v147
    %167 = vmatprep.subr.mxu0 0.0
    %168 = vmatpush1.msra.mxu0 %v148
    %169 = vmatprep.subr.mxu0 0.0
    %170 = vmatpush1.msra.mxu0 %v149
    %171 = vmatprep.subr.mxu0 0.0
    %172 = vmatpush1.msra.mxu0 %v150
    %173 = vmatprep.subr.mxu0 0.0
    %174 = vmatpush1.msra.mxu0 0.0
    %175 = vmatprep.subr.mxu0 0.0
    %176 = vmatpush1.msra.mxu0 0.0
    %177 = vmatprep.subr.mxu0 0.0
    %178 = vmatpush1.msra.mxu0 0.0
    %179 = vmatprep.subr.mxu0 0.0
    %180 = vmatpush1.msra.mxu0 0.0
    %181 = vmatprep.subr.mxu0 0.0
    %182 = vmatpush1.msra.mxu0 0.0
    %183 = vmatprep.subr.mxu0 0.0
    %184 = vmatpush1.msra.mxu0 0.0
    %185 = vmatprep.subr.mxu0 0.0
    %186 = vmatpush1.msra.mxu0 0.0
    %187 = vmatprep.subr.mxu0 0.0
    %188 = vmatpush1.msra.mxu0 0.0
    %189 = vmatprep.subr.mxu0 0.0
    %190 = vmatpush1.msra.mxu0 0.0
    %191 = vmatprep.subr.mxu0 0.0
    %192 = vmatpush1.msra.mxu0 0.0
    %193 = vmatprep.subr.mxu0 0.0
    %194 = vmatpush1.msra.mxu0 0.0
    %195 = vmatprep.subr.mxu0 0.0
    %196 = vmatpush1.msra.mxu0 0.0
    %197 = vmatprep.subr.mxu0 0.0
    %198 = vmatpush1.msra.mxu0 0.0
    %199 = vmatprep.subr.mxu0 0.0
    %200 = vmatpush1.msra.mxu0 0.0
    %201 = vmatprep.subr.mxu0 0.0
    %202 = vmatpush1.msra.mxu0 0.0
    %203 = vmatprep.subr.mxu0 0.0
    %204 = vmatpush1.msra.mxu0 0.0
    %205 = vmatprep.subr.mxu0 0.0
    %206 = vmatpush1.msra.mxu0 0.0
    %207 = vmatprep.subr.mxu0 0.0
    %208 = vmatpush1.msra.mxu0 0.0
    %209 = vmatprep.subr.mxu0 0.0
    %210 = vmatpush1.msra.mxu0 0.0
    %211 = vmatprep.subr.mxu0 0.0
    %212 = vmatpush1.msra.mxu0 0.0
    %213 = vmatprep.subr.mxu0 0.0
    %214 = vmatpush1.msra.mxu0 0.0
    %215 = vmatprep.subr.mxu0 0.0
    %216 = vmatpush1.msra.mxu0 0.0
    %217 = vmatprep.subr.mxu0 0.0
    %218 = vmatpush1.msra.mxu0 0.0
    %219 = vmatprep.subr.mxu0 0.0
    %220 = vmatpush1.msra.mxu0 0.0
    %221 = vmatprep.subr.mxu0 0.0
    %222 = vmatpush1.msra.mxu0 0.0
    %223 = vmatprep.subr.mxu0 0.0
    %224 = vmatpush1.msra.mxu0 0.0
    %225 = vmatprep.subr.mxu0 0.0
    %226 = vmatpush1.msra.mxu0 0.0
    %227 = vmatprep.subr.mxu0 0.0
    %228 = vmatpush1.msra.mxu0 0.0
    %229 = vmatprep.mubr.f32.mxu0 0.0
    %230 = vmatmul.mubr.f32.gmra.mrb[0].mxu0 %v160
    %v231 = vpop.f32.mrb[0].mxu0
    %v232 = vadd.f32 %v156, %v231
    %v233 = vpop.f32.mrb[0].mxu0
    %234 = vmatprep.mubr.f32.mxu0 0.0
    %235 = vmatmul.mubr.f32.gmra.mrb[0].mxu0 %v163
    %v236 = vpop.f32.mrb[0].mxu0
    %v237 = vadd.f32 %v156, %v236
    %v238 = vpop.f32.mrb[0].mxu0
    %239 = vdwg.mxu0
    %v240 = vld [vmem:[#allocation10] sm:$0xff]
    %v241 = vld [vmem:[#allocation10 + $0x8] sm:$0xff]
    %v242 = vld [vmem:[#allocation10 + $0x10] sm:$0xff]
    %v243 = vld [vmem:[#allocation10 + $0x18] sm:$0xff]
    %v244 = vld [vmem:[%s6] sm:$0x1]
    %v246 = vlaneseq
    %v247 = vshrl.u32 %v246, 7
    %v248 = vsub.s32 0, %v247
    %v249 = vrot.slane %v244, %v248
    %v252 = vsel %vm158, %v143, 0
    %v255 = vsel %vm158, %v144, 0
    %257 = vmatprep.subr.mxu0 0.0
    %258 = vmatpush1.msra.mxu0 %v240
    %259 = vmatprep.subr.mxu0 0.0
    %260 = vmatpush1.msra.mxu0 %v241
    %261 = vmatprep.subr.mxu0 0.0
    %262 = vmatpush1.msra.mxu0 %v242
    %263 = vmatprep.subr.mxu0 0.0
    %264 = vmatpush1.msra.mxu0 %v243
    %265 = vmatprep.subr.mxu0 0.0
    %266 = vmatpush1.msra.mxu0 0.0
    %267 = vmatprep.subr.mxu0 0.0
    %268 = vmatpush1.msra.mxu0 0.0
    %269 = vmatprep.subr.mxu0 0.0
    %270 = vmatpush1.msra.mxu0 0.0
    %271 = vmatprep.subr.mxu0 0.0
    %272 = vmatpush1.msra.mxu0 0.0
    %273 = vmatprep.subr.mxu0 0.0
    %274 = vmatpush1.msra.mxu0 0.0
    %275 = vmatprep.subr.mxu0 0.0
    %276 = vmatpush1.msra.mxu0 0.0
    %277 = vmatprep.subr.mxu0 0.0
    %278 = vmatpush1.msra.mxu0 0.0
    %279 = vmatprep.subr.mxu0 0.0
    %280 = vmatpush1.msra.mxu0 0.0
    %281 = vmatprep.subr.mxu0 0.0
    %282 = vmatpush1.msra.mxu0 0.0
    %283 = vmatprep.subr.mxu0 0.0
    %284 = vmatpush1.msra.mxu0 0.0
    %285 = vmatprep.subr.mxu0 0.0
    %286 = vmatpush1.msra.mxu0 0.0
    %287 = vmatprep.subr.mxu0 0.0
    %288 = vmatpush1.msra.mxu0 0.0
    %289 = vmatprep.subr.mxu0 0.0
    %290 = vmatpush1.msra.mxu0 0.0
    %291 = vmatprep.subr.mxu0 0.0
    %292 = vmatpush1.msra.mxu0 0.0
    %293 = vmatprep.subr.mxu0 0.0
    %294 = vmatpush1.msra.mxu0 0.0
    %295 = vmatprep.subr.mxu0 0.0
    %296 = vmatpush1.msra.mxu0 0.0
    %297 = vmatprep.subr.mxu0 0.0
    %298 = vmatpush1.msra.mxu0 0.0
    %299 = vmatprep.subr.mxu0 0.0
    %300 = vmatpush1.msra.mxu0 0.0
    %301 = vmatprep.subr.mxu0 0.0
    %302 = vmatpush1.msra.mxu0 0.0
    %303 = vmatprep.subr.mxu0 0.0
    %304 = vmatpush1.msra.mxu0 0.0
    %305 = vmatprep.subr.mxu0 0.0
    %306 = vmatpush1.msra.mxu0 0.0
    %307 = vmatprep.subr.mxu0 0.0
    %308 = vmatpush1.msra.mxu0 0.0
    %309 = vmatprep.subr.mxu0 0.0
    %310 = vmatpush1.msra.mxu0 0.0
    %311 = vmatprep.subr.mxu0 0.0
    %312 = vmatpush1.msra.mxu0 0.0
    %313 = vmatprep.subr.mxu0 0.0
    %314 = vmatpush1.msra.mxu0 0.0
    %315 = vmatprep.subr.mxu0 0.0
    %316 = vmatpush1.msra.mxu0 0.0
    %317 = vmatprep.subr.mxu0 0.0
    %318 = vmatpush1.msra.mxu0 0.0
    %319 = vmatprep.subr.mxu0 0.0
    %320 = vmatpush1.msra.mxu0 0.0
    %321 = vmatprep.mubr.f32.mxu0 0.0
    %322 = vmatmul.mubr.f32.gmra.mrb[0].mxu0 %v252
    %v323 = vpop.f32.mrb[0].mxu0
    %v324 = vadd.f32 %v249, %v323
    %v325 = vpop.f32.mrb[0].mxu0
    %326 = vmatprep.mubr.f32.mxu0 0.0
    %327 = vmatmul.mubr.f32.gmra.mrb[0].mxu0 %v255
    %v328 = vpop.f32.mrb[0].mxu0
    %v329 = vadd.f32 %v249, %v328
    %v330 = vpop.f32.mrb[0].mxu0
    %331 = vdwg.mxu0
    %v332 = vld [vmem:[#allocation11] sm:$0xff]
    %v333 = vld [vmem:[#allocation11 + $0x8] sm:$0xff]
    %v334 = vld [vmem:[#allocation11 + $0x10] sm:$0xff]
    %v335 = vld [vmem:[#allocation11 + $0x18] sm:$0xff]
    %v336 = vld [vmem:[#allocation13] sm:$0x1]
    %v338 = vlaneseq
    %v339 = vshrl.u32 %v338, 7
    %v340 = vsub.s32 0, %v339
    %v341 = vrot.slane %v336, %v340
    %v344 = vsel %vm158, %v145, 0
    %v347 = vsel %vm158, %v146, 0
    %349 = vmatprep.subr.mxu0 0.0
    %350 = vmatpush1.msra.mxu0 %v332
    %351 = vmatprep.subr.mxu0 0.0
    %352 = vmatpush1.msra.mxu0 %v333
    %353 = vmatprep.subr.mxu0 0.0
    %354 = vmatpush1.msra.mxu0 %v334
    %355 = vmatprep.subr.mxu0 0.0
    %356 = vmatpush1.msra.mxu0 %v335
    %357 = vmatprep.subr.mxu0 0.0
    %358 = vmatpush1.msra.mxu0 0.0
    %359 = vmatprep.subr.mxu0 0.0
    %360 = vmatpush1.msra.mxu0 0.0
    %361 = vmatprep.subr.mxu0 0.0
    %362 = vmatpush1.msra.mxu0 0.0
    %363 = vmatprep.subr.mxu0 0.0
    %364 = vmatpush1.msra.mxu0 0.0
    %365 = vmatprep.subr.mxu0 0.0
    %366 = vmatpush1.msra.mxu0 0.0
    %367 = vmatprep.subr.mxu0 0.0
    %368 = vmatpush1.msra.mxu0 0.0
    %369 = vmatprep.subr.mxu0 0.0
    %370 = vmatpush1.msra.mxu0 0.0
    %371 = vmatprep.subr.mxu0 0.0
    %372 = vmatpush1.msra.mxu0 0.0
    %373 = vmatprep.subr.mxu0 0.0
    %374 = vmatpush1.msra.mxu0 0.0
    %375 = vmatprep.subr.mxu0 0.0
    %376 = vmatpush1.msra.mxu0 0.0
    %377 = vmatprep.subr.mxu0 0.0
    %378 = vmatpush1.msra.mxu0 0.0
    %379 = vmatprep.subr.mxu0 0.0
    %380 = vmatpush1.msra.mxu0 0.0
    %381 = vmatprep.subr.mxu0 0.0
    %382 = vmatpush1.msra.mxu0 0.0
    %383 = vmatprep.subr.mxu0 0.0
    %384 = vmatpush1.msra.mxu0 0.0
    %385 = vmatprep.subr.mxu0 0.0
    %386 = vmatpush1.msra.mxu0 0.0
    %387 = vmatprep.subr.mxu0 0.0
    %388 = vmatpush1.msra.mxu0 0.0
    %389 = vmatprep.subr.mxu0 0.0
    %390 = vmatpush1.msra.mxu0 0.0
    %391 = vmatprep.subr.mxu0 0.0
    %392 = vmatpush1.msra.mxu0 0.0
    %393 = vmatprep.subr.mxu0 0.0
    %394 = vmatpush1.msra.mxu0 0.0
    %395 = vmatprep.subr.mxu0 0.0
    %396 = vmatpush1.msra.mxu0 0.0
    %397 = vmatprep.subr.mxu0 0.0
    %398 = vmatpush1.msra.mxu0 0.0
    %399 = vmatprep.subr.mxu0 0.0
    %400 = vmatpush1.msra.mxu0 0.0
    %401 = vmatprep.subr.mxu0 0.0
    %402 = vmatpush1.msra.mxu0 0.0
    %403 = vmatprep.subr.mxu0 0.0
    %404 = vmatpush1.msra.mxu0 0.0
    %405 = vmatprep.subr.mxu0 0.0
    %406 = vmatpush1.msra.mxu0 0.0
    %407 = vmatprep.subr.mxu0 0.0
    %408 = vmatpush1.msra.mxu0 0.0
    %409 = vmatprep.subr.mxu0 0.0
    %410 = vmatpush1.msra.mxu0 0.0
    %411 = vmatprep.subr.mxu0 0.0
    %412 = vmatpush1.msra.mxu0 0.0
    %413 = vmatprep.mubr.f32.mxu0 0.0
    %414 = vmatmul.mubr.f32.gmra.mrb[0].mxu0 %v344
    %v415 = vpop.f32.mrb[0].mxu0
    %v416 = vadd.f32 %v341, %v415
    %v417 = vpop.f32.mrb[0].mxu0
    %418 = vmatprep.mubr.f32.mxu0 0.0
    %419 = vmatmul.mubr.f32.gmra.mrb[0].mxu0 %v347
    %v420 = vpop.f32.mrb[0].mxu0
    %v421 = vadd.f32 %v341, %v420
    %v422 = vpop.f32.mrb[0].mxu0
    %423 = vdwg.mxu0
    %vm424 = vcmask 130048
    %v426 = vsel %vm424, %v232, 0
    %v429 = vsel %vm424, %v324, 0
    %431 = vmatprep.subr.mxu0 0.0
    %432 = vmatpush1.xpose.msra.mxu0 %v429
    %433 = vmatprep.subr.mxu0 0.0
    %434 = vmatpush1.xpose.msra.mxu0 0.0
    %435 = vmatprep.subr.mxu0 0.0
    %436 = vmatpush1.xpose.msra.mxu0 0.0
    %437 = vmatprep.subr.mxu0 0.0
    %438 = vmatpush1.xpose.msra.mxu0 0.0
    %439 = vmatprep.subr.mxu0 0.0
    %440 = vmatpush1.xpose.msra.mxu0 0.0
    %441 = vmatprep.subr.mxu0 0.0
    %442 = vmatpush1.xpose.msra.mxu0 0.0
    %443 = vmatprep.subr.mxu0 0.0
    %444 = vmatpush1.xpose.msra.mxu0 0.0
    %445 = vmatprep.subr.mxu0 0.0
    %446 = vmatpush1.xpose.msra.mxu0 0.0
    %447 = vmatprep.subr.mxu0 0.0
    %448 = vmatpush1.xpose.msra.mxu0 0.0
    %449 = vmatprep.subr.mxu0 0.0
    %450 = vmatpush1.xpose.msra.mxu0 0.0
    %451 = vmatprep.subr.mxu0 0.0
    %452 = vmatpush1.xpose.msra.mxu0 0.0
    %453 = vmatprep.subr.mxu0 0.0
    %454 = vmatpush1.xpose.msra.mxu0 0.0
    %455 = vmatprep.subr.mxu0 0.0
    %456 = vmatpush1.xpose.msra.mxu0 0.0
    %457 = vmatprep.subr.mxu0 0.0
    %458 = vmatpush1.xpose.msra.mxu0 0.0
    %459 = vmatprep.subr.mxu0 0.0
    %460 = vmatpush1.xpose.msra.mxu0 0.0
    %461 = vmatprep.subr.mxu0 0.0
    %462 = vmatpush1.xpose.msra.mxu0 0.0
    %463 = vmatprep.subr.mxu0 0.0
    %464 = vmatpush1.xpose.msra.mxu0 0.0
    %465 = vmatprep.subr.mxu0 0.0
    %466 = vmatpush1.xpose.msra.mxu0 0.0
    %467 = vmatprep.subr.mxu0 0.0
    %468 = vmatpush1.xpose.msra.mxu0 0.0
    %469 = vmatprep.subr.mxu0 0.0
    %470 = vmatpush1.xpose.msra.mxu0 0.0
    %471 = vmatprep.subr.mxu0 0.0
    %472 = vmatpush1.xpose.msra.mxu0 0.0
    %473 = vmatprep.subr.mxu0 0.0
    %474 = vmatpush1.xpose.msra.mxu0 0.0
    %475 = vmatprep.subr.mxu0 0.0
    %476 = vmatpush1.xpose.msra.mxu0 0.0
    %477 = vmatprep.subr.mxu0 0.0
    %478 = vmatpush1.xpose.msra.mxu0 0.0
    %479 = vmatprep.subr.mxu0 0.0
    %480 = vmatpush1.xpose.msra.mxu0 0.0
    %481 = vmatprep.subr.mxu0 0.0
    %482 = vmatpush1.xpose.msra.mxu0 0.0
    %483 = vmatprep.subr.mxu0 0.0
    %484 = vmatpush1.xpose.msra.mxu0 0.0
    %485 = vmatprep.subr.mxu0 0.0
    %486 = vmatpush1.xpose.msra.mxu0 0.0
    %487 = vmatprep.subr.mxu0 0.0
    %488 = vmatpush1.xpose.msra.mxu0 0.0
    %489 = vmatprep.subr.mxu0 0.0
    %490 = vmatpush1.xpose.msra.mxu0 0.0
    %491 = vmatprep.subr.mxu0 0.0
    %492 = vmatpush1.xpose.msra.mxu0 0.0
    %493 = vmatprep.subr.mxu0 0.0
    %494 = vmatpush1.xpose.msra.mxu0 0.0
    %495 = vmatprep.mubr.f32.mxu0 0.0
    %496 = vmatmul.mubr.f32.gmra.mrb[0].mxu0 %v426
    %v497 = vpop.f32.mrb[0].mxu0
    %v498 = vadd.f32 0.0, %v497
    %v499 = vpop.f32.mrb[0].mxu0
    %500 = vdwg.mxu0
    %v502 = vsel %vm424, %v237, 0
    %v505 = vsel %vm424, %v329, 0
    %507 = vmatprep.subr.mxu0 0.0
    %508 = vmatpush1.xpose.msra.mxu0 %v505
    %509 = vmatprep.subr.mxu0 0.0
    %510 = vmatpush1.xpose.msra.mxu0 0.0
    %511 = vmatprep.subr.mxu0 0.0
    %512 = vmatpush1.xpose.msra.mxu0 0.0
    %513 = vmatprep.subr.mxu0 0.0
    %514 = vmatpush1.xpose.msra.mxu0 0.0
    %515 = vmatprep.subr.mxu0 0.0
    %516 = vmatpush1.xpose.msra.mxu0 0.0
    %517 = vmatprep.subr.mxu0 0.0
    %518 = vmatpush1.xpose.msra.mxu0 0.0
    %519 = vmatprep.subr.mxu0 0.0
    %520 = vmatpush1.xpose.msra.mxu0 0.0
    %521 = vmatprep.subr.mxu0 0.0
    %522 = vmatpush1.xpose.msra.mxu0 0.0
    %523 = vmatprep.subr.mxu0 0.0
    %524 = vmatpush1.xpose.msra.mxu0 0.0
    %525 = vmatprep.subr.mxu0 0.0
    %526 = vmatpush1.xpose.msra.mxu0 0.0
    %527 = vmatprep.subr.mxu0 0.0
    %528 = vmatpush1.xpose.msra.mxu0 0.0
    %529 = vmatprep.subr.mxu0 0.0
    %530 = vmatpush1.xpose.msra.mxu0 0.0
    %531 = vmatprep.subr.mxu0 0.0
    %532 = vmatpush1.xpose.msra.mxu0 0.0
    %533 = vmatprep.subr.mxu0 0.0
    %534 = vmatpush1.xpose.msra.mxu0 0.0
    %535 = vmatprep.subr.mxu0 0.0
    %536 = vmatpush1.xpose.msra.mxu0 0.0
    %537 = vmatprep.subr.mxu0 0.0
    %538 = vmatpush1.xpose.msra.mxu0 0.0
    %539 = vmatprep.subr.mxu0 0.0
    %540 = vmatpush1.xpose.msra.mxu0 0.0
    %541 = vmatprep.subr.mxu0 0.0
    %542 = vmatpush1.xpose.msra.mxu0 0.0
    %543 = vmatprep.subr.mxu0 0.0
    %544 = vmatpush1.xpose.msra.mxu0 0.0
    %545 = vmatprep.subr.mxu0 0.0
    %546 = vmatpush1.xpose.msra.mxu0 0.0
    %547 = vmatprep.subr.mxu0 0.0
    %548 = vmatpush1.xpose.msra.mxu0 0.0
    %549 = vmatprep.subr.mxu0 0.0
    %550 = vmatpush1.xpose.msra.mxu0 0.0
    %551 = vmatprep.subr.mxu0 0.0
    %552 = vmatpush1.xpose.msra.mxu0 0.0
    %553 = vmatprep.subr.mxu0 0.0
    %554 = vmatpush1.xpose.msra.mxu0 0.0
    %555 = vmatprep.subr.mxu0 0.0
    %556 = vmatpush1.xpose.msra.mxu0 0.0
    %557 = vmatprep.subr.mxu0 0.0
    %558 = vmatpush1.xpose.msra.mxu0 0.0
    %559 = vmatprep.subr.mxu0 0.0
    %560 = vmatpush1.xpose.msra.mxu0 0.0
    %561 = vmatprep.subr.mxu0 0.0
    %562 = vmatpush1.xpose.msra.mxu0 0.0
    %563 = vmatprep.subr.mxu0 0.0
    %564 = vmatpush1.xpose.msra.mxu0 0.0
    %565 = vmatprep.subr.mxu0 0.0
    %566 = vmatpush1.xpose.msra.mxu0 0.0
    %567 = vmatprep.subr.mxu0 0.0
    %568 = vmatpush1.xpose.msra.mxu0 0.0
    %569 = vmatprep.subr.mxu0 0.0
    %570 = vmatpush1.xpose.msra.mxu0 0.0
    %571 = vmatprep.mubr.f32.mxu0 0.0
    %572 = vmatmul.mubr.f32.gmra.mrb[0].mxu0 %v502
    %v573 = vpop.f32.mrb[0].mxu0
    %v574 = vadd.f32 0.0, %v573
    %v575 = vpop.f32.mrb[0].mxu0
    %576 = vdwg.mxu0
    %v577 = vmul.f32 %v498, 0.25
    %v578 = vmul.f32 %v574, 0.25
    %vm579 = vcmask 64512
    %v580 = vsel %vm579, %v577, -inf
    %581 = vmax.xlane.f32.xlu0 %v580
    %v582 = vpop.xlane.xlu0 %581
    %v583 = vsel %vm579, %v578, -inf
    %584 = vmax.xlane.f32.xlu0 %v583
    %v585 = vpop.xlane.xlu0 %584
    %v586 = vsub.f32 %v577, %v582
    %v587 = vsub.f32 %v578, %v585
    %v588 = vmul.f32 %v586, 1.442695
    %v589 = vpow.pop %v588
    %v590 = vmul.f32 %v587, 1.442695
    %v591 = vpow.pop %v590
    %v592 = vsel %vm579, %v589, 0.0
    %593 = vadd.xlane.f32.xlu0 %v592
    %v594 = vpop.xlane.xlu0 %593
    %v595 = vsel %vm579, %v591, 0.0
    %596 = vadd.xlane.f32.xlu0 %v595
    %v597 = vpop.xlane.xlu0 %596
    %v598 = vrcp.pop %v594
    %v599 = vrcp.pop %v597
    %v600 = vmul.f32 %v589, %v598
    %v601 = vmul.f32 %v591, %v599
    %602 = vst.msk [vmem:[#allocation15] sm:$0xff] %vm579, %v600
    %603 = vst.msk [vmem:[#allocation15 + $0x8] sm:$0xff] %vm579, %v601
    %v605 = vsel %vm579, %v600, 0
    %607 = vmatprep.subr.mxu0 0.0
    %608 = vmatpush1.msra.mxu0 %v416
    %609 = vmatprep.subr.mxu0 0.0
    %610 = vmatpush1.msra.mxu0 0.0
    %611 = vmatprep.subr.mxu0 0.0
    %612 = vmatpush1.msra.mxu0 0.0
    %613 = vmatprep.subr.mxu0 0.0
    %614 = vmatpush1.msra.mxu0 0.0
    %615 = vmatprep.subr.mxu0 0.0
    %616 = vmatpush1.msra.mxu0 0.0
    %617 = vmatprep.subr.mxu0 0.0
    %618 = vmatpush1.msra.mxu0 0.0
    %619 = vmatprep.subr.mxu0 0.0
    %620 = vmatpush1.msra.mxu0 0.0
    %621 = vmatprep.subr.mxu0 0.0
    %622 = vmatpush1.msra.mxu0 0.0
    %623 = vmatprep.subr.mxu0 0.0
    %624 = vmatpush1.msra.mxu0 0.0
    %625 = vmatprep.subr.mxu0 0.0
    %626 = vmatpush1.msra.mxu0 0.0
    %627 = vmatprep.subr.mxu0 0.0
    %628 = vmatpush1.msra.mxu0 0.0
    %629 = vmatprep.subr.mxu0 0.0
    %630 = vmatpush1.msra.mxu0 0.0
    %631 = vmatprep.subr.mxu0 0.0
    %632 = vmatpush1.msra.mxu0 0.0
    %633 = vmatprep.subr.mxu0 0.0
    %634 = vmatpush1.msra.mxu0 0.0
    %635 = vmatprep.subr.mxu0 0.0
    %636 = vmatpush1.msra.mxu0 0.0
    %637 = vmatprep.subr.mxu0 0.0
    %638 = vmatpush1.msra.mxu0 0.0
    %639 = vmatprep.subr.mxu0 0.0
    %640 = vmatpush1.msra.mxu0 0.0
    %641 = vmatprep.subr.mxu0 0.0
    %642 = vmatpush1.msra.mxu0 0.0
    %643 = vmatprep.subr.mxu0 0.0
    %644 = vmatpush1.msra.mxu0 0.0
    %645 = vmatprep.subr.mxu0 0.0
    %646 = vmatpush1.msra.mxu0 0.0
    %647 = vmatprep.subr.mxu0 0.0
    %648 = vmatpush1.msra.mxu0 0.0
    %649 = vmatprep.subr.mxu0 0.0
    %650 = vmatpush1.msra.mxu0 0.0
    %651 = vmatprep.subr.mxu0 0.0
    %652 = vmatpush1.msra.mxu0 0.0
    %653 = vmatprep.subr.mxu0 0.0
    %654 = vmatpush1.msra.mxu0 0.0
    %655 = vmatprep.subr.mxu0 0.0
    %656 = vmatpush1.msra.mxu0 0.0
    %657 = vmatprep.subr.mxu0 0.0
    %658 = vmatpush1.msra.mxu0 0.0
    %659 = vmatprep.subr.mxu0 0.0
    %660 = vmatpush1.msra.mxu0 0.0
    %661 = vmatprep.subr.mxu0 0.0
    %662 = vmatpush1.msra.mxu0 0.0
    %663 = vmatprep.subr.mxu0 0.0
    %664 = vmatpush1.msra.mxu0 0.0
    %665 = vmatprep.subr.mxu0 0.0
    %666 = vmatpush1.msra.mxu0 0.0
    %667 = vmatprep.subr.mxu0 0.0
    %668 = vmatpush1.msra.mxu0 0.0
    %669 = vmatprep.subr.mxu0 0.0
    %670 = vmatpush1.msra.mxu0 0.0
    %671 = vmatprep.mubr.f32.mxu0 0.0
    %672 = vmatmul.mubr.f32.gmra.mrb[0].mxu0 %v605
    %v673 = vpop.f32.mrb[0].mxu0
    %v674 = vadd.f32 0.0, %v673
    %v675 = vpop.f32.mrb[0].mxu0
    %676 = vdwg.mxu0
    %v678 = vsel %vm579, %v601, 0
    %680 = vmatprep.subr.mxu0 0.0
    %681 = vmatpush1.msra.mxu0 %v421
    %682 = vmatprep.subr.mxu0 0.0
    %683 = vmatpush1.msra.mxu0 0.0
    %684 = vmatprep.subr.mxu0 0.0
    %685 = vmatpush1.msra.mxu0 0.0
    %686 = vmatprep.subr.mxu0 0.0
    %687 = vmatpush1.msra.mxu0 0.0
    %688 = vmatprep.subr.mxu0 0.0
    %689 = vmatpush1.msra.mxu0 0.0
    %690 = vmatprep.subr.mxu0 0.0
    %691 = vmatpush1.msra.mxu0 0.0
    %692 = vmatprep.subr.mxu0 0.0
    %693 = vmatpush1.msra.mxu0 0.0
    %694 = vmatprep.subr.mxu0 0.0
    %695 = vmatpush1.msra.mxu0 0.0
    %696 = vmatprep.subr.mxu0 0.0
    %697 = vmatpush1.msra.mxu0 0.0
    %698 = vmatprep.subr.mxu0 0.0
    %699 = vmatpush1.msra.mxu0 0.0
    %700 = vmatprep.subr.mxu0 0.0
    %701 = vmatpush1.msra.mxu0 0.0
    %702 = vmatprep.subr.mxu0 0.0
    %703 = vmatpush1.msra.mxu0 0.0
    %704 = vmatprep.subr.mxu0 0.0
    %705 = vmatpush1.msra.mxu0 0.0
    %706 = vmatprep.subr.mxu0 0.0
    %707 = vmatpush1.msra.mxu0 0.0
    %708 = vmatprep.subr.mxu0 0.0
    %709 = vmatpush1.msra.mxu0 0.0
    %710 = vmatprep.subr.mxu0 0.0
    %711 = vmatpush1.msra.mxu0 0.0
    %712 = vmatprep.subr.mxu0 0.0
    %713 = vmatpush1.msra.mxu0 0.0
    %714 = vmatprep.subr.mxu0 0.0
    %715 = vmatpush1.msra.mxu0 0.0
    %716 = vmatprep.subr.mxu0 0.0
    %717 = vmatpush1.msra.mxu0 0.0
    %718 = vmatprep.subr.mxu0 0.0
    %719 = vmatpush1.msra.mxu0 0.0
    %720 = vmatprep.subr.mxu0 0.0
    %721 = vmatpush1.msra.mxu0 0.0
    %722 = vmatprep.subr.mxu0 0.0
    %723 = vmatpush1.msra.mxu0 0.0
    %724 = vmatprep.subr.mxu0 0.0
    %725 = vmatpush1.msra.mxu0 0.0
    %726 = vmatprep.subr.mxu0 0.0
    %727 = vmatpush1.msra.mxu0 0.0
    %728 = vmatprep.subr.mxu0 0.0
    %729 = vmatpush1.msra.mxu0 0.0
    %730 = vmatprep.subr.mxu0 0.0
    %731 = vmatpush1.msra.mxu0 0.0
    %732 = vmatprep.subr.mxu0 0.0
    %733 = vmatpush1.msra.mxu0 0.0
    %734 = vmatprep.subr.mxu0 0.0
    %735 = vmatpush1.msra.mxu0 0.0
    %736 = vmatprep.subr.mxu0 0.0
    %737 = vmatpush1.msra.mxu0 0.0
    %738 = vmatprep.subr.mxu0 0.0
    %739 = vmatpush1.msra.mxu0 0.0
    %740 = vmatprep.subr.mxu0 0.0
    %741 = vmatpush1.msra.mxu0 0.0
    %742 = vmatprep.subr.mxu0 0.0
    %743 = vmatpush1.msra.mxu0 0.0
    %744 = vmatprep.mubr.f32.mxu0 0.0
    %745 = vmatmul.mubr.f32.gmra.mrb[0].mxu0 %v678
    %v746 = vpop.f32.mrb[0].mxu0
    %v747 = vadd.f32 0.0, %v746
    %v748 = vpop.f32.mrb[0].mxu0
    %749 = vdwg.mxu0
    %v750 = vld [vmem:[%s9] sm:$0xff]
    %v751 = vld [vmem:[%s9 + $0x8] sm:$0xff]
    %752 = vrot.lane.b32.xlu0 %v232, 112
    %v753 = vpop.permute.xlu0 %752
    %754 = vrot.lane.b32.xlu0 %v324, 112
    %v755 = vpop.permute.xlu0 %754
    %v756 = vsel %vm424, %v753, 0
    %v758 = vsel %vm424, %v755, 0
    %760 = vmatprep.subr.mxu0 0.0
    %761 = vmatpush1.xpose.msra.mxu0 %v758
    %762 = vmatprep.subr.mxu0 0.0
    %763 = vmatpush1.xpose.msra.mxu0 0.0
    %764 = vmatprep.subr.mxu0 0.0
    %765 = vmatpush1.xpose.msra.mxu0 0.0
    %766 = vmatprep.subr.mxu0 0.0
    %767 = vmatpush1.xpose.msra.mxu0 0.0
    %768 = vmatprep.subr.mxu0 0.0
    %769 = vmatpush1.xpose.msra.mxu0 0.0
    %770 = vmatprep.subr.mxu0 0.0
    %771 = vmatpush1.xpose.msra.mxu0 0.0
    %772 = vmatprep.subr.mxu0 0.0
    %773 = vmatpush1.xpose.msra.mxu0 0.0
    %774 = vmatprep.subr.mxu0 0.0
    %775 = vmatpush1.xpose.msra.mxu0 0.0
    %776 = vmatprep.subr.mxu0 0.0
    %777 = vmatpush1.xpose.msra.mxu0 0.0
    %778 = vmatprep.subr.mxu0 0.0
    %779 = vmatpush1.xpose.msra.mxu0 0.0
    %780 = vmatprep.subr.mxu0 0.0
    %781 = vmatpush1.xpose.msra.mxu0 0.0
    %782 = vmatprep.subr.mxu0 0.0
    %783 = vmatpush1.xpose.msra.mxu0 0.0
    %784 = vmatprep.subr.mxu0 0.0
    %785 = vmatpush1.xpose.msra.mxu0 0.0
    %786 = vmatprep.subr.mxu0 0.0
    %787 = vmatpush1.xpose.msra.mxu0 0.0
    %788 = vmatprep.subr.mxu0 0.0
    %789 = vmatpush1.xpose.msra.mxu0 0.0
    %790 = vmatprep.subr.mxu0 0.0
    %791 = vmatpush1.xpose.msra.mxu0 0.0
    %792 = vmatprep.subr.mxu0 0.0
    %793 = vmatpush1.xpose.msra.mxu0 0.0
    %794 = vmatprep.subr.mxu0 0.0
    %795 = vmatpush1.xpose.msra.mxu0 0.0
    %796 = vmatprep.subr.mxu0 0.0
    %797 = vmatpush1.xpose.msra.mxu0 0.0
    %798 = vmatprep.subr.mxu0 0.0
    %799 = vmatpush1.xpose.msra.mxu0 0.0
    %800 = vmatprep.subr.mxu0 0.0
    %801 = vmatpush1.xpose.msra.mxu0 0.0
    %802 = vmatprep.subr.mxu0 0.0
    %803 = vmatpush1.xpose.msra.mxu0 0.0
    %804 = vmatprep.subr.mxu0 0.0
    %805 = vmatpush1.xpose.msra.mxu0 0.0
    %806 = vmatprep.subr.mxu0 0.0
    %807 = vmatpush1.xpose.msra.mxu0 0.0
    %808 = vmatprep.subr.mxu0 0.0
    %809 = vmatpush1.xpose.msra.mxu0 0.0
    %810 = vmatprep.subr.mxu0 0.0
    %811 = vmatpush1.xpose.msra.mxu0 0.0
    %812 = vmatprep.subr.mxu0 0.0
    %813 = vmatpush1.xpose.msra.mxu0 0.0
    %814 = vmatprep.subr.mxu0 0.0
    %815 = vmatpush1.xpose.msra.mxu0 0.0
    %816 = vmatprep.subr.mxu0 0.0
    %817 = vmatpush1.xpose.msra.mxu0 0.0
    %818 = vmatprep.subr.mxu0 0.0
    %819 = vmatpush1.xpose.msra.mxu0 0.0
    %820 = vmatprep.subr.mxu0 0.0
    %821 = vmatpush1.xpose.msra.mxu0 0.0
    %822 = vmatprep.subr.mxu0 0.0
    %823 = vmatpush1.xpose.msra.mxu0 0.0
    %824 = vmatprep.mubr.f32.mxu0 0.0
    %825 = vmatmul.mubr.f32.gmra.mrb[0].mxu0 %v756
    %v826 = vpop.f32.mrb[0].mxu0
    %v827 = vadd.f32 0.0, %v826
    %v828 = vpop.f32.mrb[0].mxu0
    %829 = vdwg.mxu0
    %830 = vrot.lane.b32.xlu0 %v237, 112
    %v831 = vpop.permute.xlu0 %830
    %832 = vrot.lane.b32.xlu0 %v329, 112
    %v833 = vpop.permute.xlu0 %832
    %v834 = vsel %vm424, %v831, 0
    %v836 = vsel %vm424, %v833, 0
    %838 = vmatprep.subr.mxu0 0.0
    %839 = vmatpush1.xpose.msra.mxu0 %v836
    %840 = vmatprep.subr.mxu0 0.0
    %841 = vmatpush1.xpose.msra.mxu0 0.0
    %842 = vmatprep.subr.mxu0 0.0
    %843 = vmatpush1.xpose.msra.mxu0 0.0
    %844 = vmatprep.subr.mxu0 0.0
    %845 = vmatpush1.xpose.msra.mxu0 0.0
    %846 = vmatprep.subr.mxu0 0.0
    %847 = vmatpush1.xpose.msra.mxu0 0.0
    %848 = vmatprep.subr.mxu0 0.0
    %849 = vmatpush1.xpose.msra.mxu0 0.0
    %850 = vmatprep.subr.mxu0 0.0
    %851 = vmatpush1.xpose.msra.mxu0 0.0
    %852 = vmatprep.subr.mxu0 0.0
    %853 = vmatpush1.xpose.msra.mxu0 0.0
    %854 = vmatprep.subr.mxu0 0.0
    %855 = vmatpush1.xpose.msra.mxu0 0.0
    %856 = vmatprep.subr.mxu0 0.0
    %857 = vmatpush1.xpose.msra.mxu0 0.0
    %858 = vmatprep.subr.mxu0 0.0
    %859 = vmatpush1.xpose.msra.mxu0 0.0
    %860 = vmatprep.subr.mxu0 0.0
    %861 = vmatpush1.xpose.msra.mxu0 0.0
    %862 = vmatprep.subr.mxu0 0.0
    %863 = vmatpush1.xpose.msra.mxu0 0.0
    %864 = vmatprep.subr.mxu0 0.0
    %865 = vmatpush1.xpose.msra.mxu0 0.0
    %866 = vmatprep.subr.mxu0 0.0
    %867 = vmatpush1.xpose.msra.mxu0 0.0
    %868 = vmatprep.subr.mxu0 0.0
    %869 = vmatpush1.xpose.msra.mxu0 0.0
    %870 = vmatprep.subr.mxu0 0.0
    %871 = vmatpush1.xpose.msra.mxu0 0.0
    %872 = vmatprep.subr.mxu0 0.0
    %873 = vmatpush1.xpose.msra.mxu0 0.0
    %874 = vmatprep.subr.mxu0 0.0
    %875 = vmatpush1.xpose.msra.mxu0 0.0
    %876 = vmatprep.subr.mxu0 0.0
    %877 = vmatpush1.xpose.msra.mxu0 0.0
    %878 = vmatprep.subr.mxu0 0.0
    %879 = vmatpush1.xpose.msra.mxu0 0.0
    %880 = vmatprep.subr.mxu0 0.0
    %881 = vmatpush1.xpose.msra.mxu0 0.0
    %882 = vmatprep.subr.mxu0 0.0
    %883 = vmatpush1.xpose.msra.mxu0 0.0
    %884 = vmatprep.subr.mxu0 0.0
    %885 = vmatpush1.xpose.msra.mxu0 0.0
    %886 = vmatprep.subr.mxu0 0.0
    %887 = vmatpush1.xpose.msra.mxu0 0.0
    %888 = vmatprep.subr.mxu0 0.0
    %889 = vmatpush1.xpose.msra.mxu0 0.0
    %890 = vmatprep.subr.mxu0 0.0
    %891 = vmatpush1.xpose.msra.mxu0 0.0
    %892 = vmatprep.subr.mxu0 0.0
    %893 = vmatpush1.xpose.msra.mxu0 0.0
    %894 = vmatprep.subr.mxu0 0.0
    %895 = vmatpush1.xpose.msra.mxu0 0.0
    %896 = vmatprep.subr.mxu0 0.0
    %897 = vmatpush1.xpose.msra.mxu0 0.0
    %898 = vmatprep.subr.mxu0 0.0
    %899 = vmatpush1.xpose.msra.mxu0 0.0
    %900 = vmatprep.subr.mxu0 0.0
    %901 = vmatpush1.xpose.msra.mxu0 0.0
    %902 = vmatprep.mubr.f32.mxu0 0.0
    %903 = vmatmul.mubr.f32.gmra.mrb[0].mxu0 %v834
    %v904 = vpop.f32.mrb[0].mxu0
    %v905 = vadd.f32 0.0, %v904
    %v906 = vpop.f32.mrb[0].mxu0
    %907 = vdwg.mxu0
    %v908 = vmul.f32 %v827, 0.25
    %v909 = vmul.f32 %v905, 0.25
    %v910 = vsel %vm579, %v908, -inf
    %911 = vmax.xlane.f32.xlu0 %v910
    %v912 = vpop.xlane.xlu0 %911
    %v913 = vsel %vm579, %v909, -inf
    %914 = vmax.xlane.f32.xlu0 %v913
    %v915 = vpop.xlane.xlu0 %914
    %v916 = vsub.f32 %v908, %v912
    %v917 = vsub.f32 %v909, %v915
    %v918 = vmul.f32 %v916, 1.442695
    %v919 = vpow.pop %v918
    %v920 = vmul.f32 %v917, 1.442695
    %v921 = vpow.pop %v920
    %v922 = vsel %vm579, %v919, 0.0
    %923 = vadd.xlane.f32.xlu0 %v922
    %v924 = vpop.xlane.xlu0 %923
    %v925 = vsel %vm579, %v921, 0.0
    %926 = vadd.xlane.f32.xlu0 %v925
    %v927 = vpop.xlane.xlu0 %926
    %v928 = vrcp.pop %v924
    %v929 = vrcp.pop %v927
    %v930 = vmul.f32 %v919, %v928
    %v931 = vmul.f32 %v921, %v929
    %s932 = scalar_lea.vmem [#allocation15], 16
    %933 = vst.msk [vmem:[%s932] sm:$0xff] %vm579, %v930
    %934 = vst.msk [vmem:[%s932 + $0x8] sm:$0xff] %vm579, %v931
    %936 = vrot.lane.b32.xlu0 %v416, 112
    %v937 = vpop.permute.xlu0 %936
    %v940 = vsel %vm579, %v930, 0
    %942 = vmatprep.subr.mxu0 0.0
    %943 = vmatpush1.msra.mxu0 %v937
    %944 = vmatprep.subr.mxu0 0.0
    %945 = vmatpush1.msra.mxu0 0.0
    %946 = vmatprep.subr.mxu0 0.0
    %947 = vmatpush1.msra.mxu0 0.0
    %948 = vmatprep.subr.mxu0 0.0
    %949 = vmatpush1.msra.mxu0 0.0
    %950 = vmatprep.subr.mxu0 0.0
    %951 = vmatpush1.msra.mxu0 0.0
    %952 = vmatprep.subr.mxu0 0.0
    %953 = vmatpush1.msra.mxu0 0.0
    %954 = vmatprep.subr.mxu0 0.0
    %955 = vmatpush1.msra.mxu0 0.0
    %956 = vmatprep.subr.mxu0 0.0
    %957 = vmatpush1.msra.mxu0 0.0
    %958 = vmatprep.subr.mxu0 0.0
    %959 = vmatpush1.msra.mxu0 0.0
    %960 = vmatprep.subr.mxu0 0.0
    %961 = vmatpush1.msra.mxu0 0.0
    %962 = vmatprep.subr.mxu0 0.0
    %963 = vmatpush1.msra.mxu0 0.0
    %964 = vmatprep.subr.mxu0 0.0
    %965 = vmatpush1.msra.mxu0 0.0
    %966 = vmatprep.subr.mxu0 0.0
    %967 = vmatpush1.msra.mxu0 0.0
    %968 = vmatprep.subr.mxu0 0.0
    %969 = vmatpush1.msra.mxu0 0.0
    %970 = vmatprep.subr.mxu0 0.0
    %971 = vmatpush1.msra.mxu0 0.0
    %972 = vmatprep.subr.mxu0 0.0
    %973 = vmatpush1.msra.mxu0 0.0
    %974 = vmatprep.subr.mxu0 0.0
    %975 = vmatpush1.msra.mxu0 0.0
    %976 = vmatprep.subr.mxu0 0.0
    %977 = vmatpush1.msra.mxu0 0.0
    %978 = vmatprep.subr.mxu0 0.0
    %979 = vmatpush1.msra.mxu0 0.0
    %980 = vmatprep.subr.mxu0 0.0
    %981 = vmatpush1.msra.mxu0 0.0
    %982 = vmatprep.subr.mxu0 0.0
    %983 = vmatpush1.msra.mxu0 0.0
    %984 = vmatprep.subr.mxu0 0.0
    %985 = vmatpush1.msra.mxu0 0.0
    %986 = vmatprep.subr.mxu0 0.0
    %987 = vmatpush1.msra.mxu0 0.0
    %988 = vmatprep.subr.mxu0 0.0
    %989 = vmatpush1.msra.mxu0 0.0
    %990 = vmatprep.subr.mxu0 0.0
    %991 = vmatpush1.msra.mxu0 0.0
    %992 = vmatprep.subr.mxu0 0.0
    %993 = vmatpush1.msra.mxu0 0.0
    %994 = vmatprep.subr.mxu0 0.0
    %995 = vmatpush1.msra.mxu0 0.0
    %996 = vmatprep.subr.mxu0 0.0
    %997 = vmatpush1.msra.mxu0 0.0
    %998 = vmatprep.subr.mxu0 0.0
    %999 = vmatpush1.msra.mxu0 0.0
    %1000 = vmatprep.subr.mxu0 0.0
    %1001 = vmatpush1.msra.mxu0 0.0
    %1002 = vmatprep.subr.mxu0 0.0
    %1003 = vmatpush1.msra.mxu0 0.0
    %1004 = vmatprep.subr.mxu0 0.0
    %1005 = vmatpush1.msra.mxu0 0.0
    %1006 = vmatprep.mubr.f32.mxu0 0.0
    %1007 = vmatmul.mubr.f32.gmra.mrb[0].mxu0 %v940
    %v1008 = vpop.f32.mrb[0].mxu0
    %v1009 = vadd.f32 0.0, %v1008
    %v1010 = vpop.f32.mrb[0].mxu0
    %1011 = vdwg.mxu0
    %1013 = vrot.lane.b32.xlu0 %v421, 112
    %v1014 = vpop.permute.xlu0 %1013
    %v1017 = vsel %vm579, %v931, 0
    %1019 = vmatprep.subr.mxu0 0.0
    %1020 = vmatpush1.msra.mxu0 %v1014
    %1021 = vmatprep.subr.mxu0 0.0
    %1022 = vmatpush1.msra.mxu0 0.0
    %1023 = vmatprep.subr.mxu0 0.0
    %1024 = vmatpush1.msra.mxu0 0.0
    %1025 = vmatprep.subr.mxu0 0.0
    %1026 = vmatpush1.msra.mxu0 0.0
    %1027 = vmatprep.subr.mxu0 0.0
    %1028 = vmatpush1.msra.mxu0 0.0
    %1029 = vmatprep.subr.mxu0 0.0
    %1030 = vmatpush1.msra.mxu0 0.0
    %1031 = vmatprep.subr.mxu0 0.0
    %1032 = vmatpush1.msra.mxu0 0.0
    %1033 = vmatprep.subr.mxu0 0.0
    %1034 = vmatpush1.msra.mxu0 0.0
    %1035 = vmatprep.subr.mxu0 0.0
    %1036 = vmatpush1.msra.mxu0 0.0
    %1037 = vmatprep.subr.mxu0 0.0
    %1038 = vmatpush1.msra.mxu0 0.0
    %1039 = vmatprep.subr.mxu0 0.0
    %1040 = vmatpush1.msra.mxu0 0.0
    %1041 = vmatprep.subr.mxu0 0.0
    %1042 = vmatpush1.msra.mxu0 0.0
    %1043 = vmatprep.subr.mxu0 0.0
    %1044 = vmatpush1.msra.mxu0 0.0
    %1045 = vmatprep.subr.mxu0 0.0
    %1046 = vmatpush1.msra.mxu0 0.0
    %1047 = vmatprep.subr.mxu0 0.0
    %1048 = vmatpush1.msra.mxu0 0.0
    %1049 = vmatprep.subr.mxu0 0.0
    %1050 = vmatpush1.msra.mxu0 0.0
    %1051 = vmatprep.subr.mxu0 0.0
    %1052 = vmatpush1.msra.mxu0 0.0
    %1053 = vmatprep.subr.mxu0 0.0
    %1054 = vmatpush1.msra.mxu0 0.0
    %1055 = vmatprep.subr.mxu0 0.0
    %1056 = vmatpush1.msra.mxu0 0.0
    %1057 = vmatprep.subr.mxu0 0.0
    %1058 = vmatpush1.msra.mxu0 0.0
    %1059 = vmatprep.subr.mxu0 0.0
    %1060 = vmatpush1.msra.mxu0 0.0
    %1061 = vmatprep.subr.mxu0 0.0
    %1062 = vmatpush1.msra.mxu0 0.0
    %1063 = vmatprep.subr.mxu0 0.0
    %1064 = vmatpush1.msra.mxu0 0.0
    %1065 = vmatprep.subr.mxu0 0.0
    %1066 = vmatpush1.msra.mxu0 0.0
    %1067 = vmatprep.subr.mxu0 0.0
    %1068 = vmatpush1.msra.mxu0 0.0
    %1069 = vmatprep.subr.mxu0 0.0
    %1070 = vmatpush1.msra.mxu0 0.0
    %1071 = vmatprep.subr.mxu0 0.0
    %1072 = vmatpush1.msra.mxu0 0.0
    %1073 = vmatprep.subr.mxu0 0.0
    %1074 = vmatpush1.msra.mxu0 0.0
    %1075 = vmatprep.subr.mxu0 0.0
    %1076 = vmatpush1.msra.mxu0 0.0
    %1077 = vmatprep.subr.mxu0 0.0
    %1078 = vmatpush1.msra.mxu0 0.0
    %1079 = vmatprep.subr.mxu0 0.0
    %1080 = vmatpush1.msra.mxu0 0.0
    %1081 = vmatprep.subr.mxu0 0.0
    %1082 = vmatpush1.msra.mxu0 0.0
    %1083 = vmatprep.mubr.f32.mxu0 0.0
    %1084 = vmatmul.mubr.f32.gmra.mrb[0].mxu0 %v1017
    %v1085 = vpop.f32.mrb[0].mxu0
    %v1086 = vadd.f32 0.0, %v1085
    %v1087 = vpop.f32.mrb[0].mxu0
    %1088 = vdwg.mxu0
    %v1089 = vld [vmem:[%s9 + $0x10] sm:$0xff]
    %v1090 = vld [vmem:[%s9 + $0x18] sm:$0xff]
    %v1092 = vsel %vm424, %v1009, 0
    %v1095 = vsel %vm424, %v1086, 0
    %1097 = vmatprep.subr.mxu0 0.0
    %1098 = vmatpush1.msra.mxu0 %v1089
    %1099 = vmatprep.subr.mxu0 0.0
    %1100 = vmatpush1.msra.mxu0 %v1090
    %1101 = vmatprep.subr.mxu0 0.0
    %1102 = vmatpush1.msra.mxu0 0.0
    %1103 = vmatprep.subr.mxu0 0.0
    %1104 = vmatpush1.msra.mxu0 0.0
    %1105 = vmatprep.subr.mxu0 0.0
    %1106 = vmatpush1.msra.mxu0 0.0
    %1107 = vmatprep.subr.mxu0 0.0
    %1108 = vmatpush1.msra.mxu0 0.0
    %1109 = vmatprep.subr.mxu0 0.0
    %1110 = vmatpush1.msra.mxu0 0.0
    %1111 = vmatprep.subr.mxu0 0.0
    %1112 = vmatpush1.msra.mxu0 0.0
    %1113 = vmatprep.subr.mxu0 0.0
    %1114 = vmatpush1.msra.mxu0 0.0
    %1115 = vmatprep.subr.mxu0 0.0
    %1116 = vmatpush1.msra.mxu0 0.0
    %1117 = vmatprep.subr.mxu0 0.0
    %1118 = vmatpush1.msra.mxu0 0.0
    %1119 = vmatprep.subr.mxu0 0.0
    %1120 = vmatpush1.msra.mxu0 0.0
    %1121 = vmatprep.subr.mxu0 0.0
    %1122 = vmatpush1.msra.mxu0 0.0
    %1123 = vmatprep.subr.mxu0 0.0
    %1124 = vmatpush1.msra.mxu0 0.0
    %1125 = vmatprep.subr.mxu0 0.0
    %1126 = vmatpush1.msra.mxu0 0.0
    %1127 = vmatprep.subr.mxu0 0.0
    %1128 = vmatpush1.msra.mxu0 0.0
    %1129 = vmatprep.subr.mxu0 0.0
    %1130 = vmatpush1.msra.mxu0 0.0
    %1131 = vmatprep.subr.mxu0 0.0
    %1132 = vmatpush1.msra.mxu0 0.0
    %1133 = vmatprep.subr.mxu0 0.0
    %1134 = vmatpush1.msra.mxu0 0.0
    %1135 = vmatprep.subr.mxu0 0.0
    %1136 = vmatpush1.msra.mxu0 0.0
    %1137 = vmatprep.subr.mxu0 0.0
    %1138 = vmatpush1.msra.mxu0 0.0
    %1139 = vmatprep.subr.mxu0 0.0
    %1140 = vmatpush1.msra.mxu0 0.0
    %1141 = vmatprep.subr.mxu0 0.0
    %1142 = vmatpush1.msra.mxu0 0.0
    %1143 = vmatprep.subr.mxu0 0.0
    %1144 = vmatpush1.msra.mxu0 0.0
    %1145 = vmatprep.subr.mxu0 0.0
    %1146 = vmatpush1.msra.mxu0 0.0
    %1147 = vmatprep.subr.mxu0 0.0
    %1148 = vmatpush1.msra.mxu0 0.0
    %1149 = vmatprep.subr.mxu0 0.0
    %1150 = vmatpush1.msra.mxu0 0.0
    %1151 = vmatprep.subr.mxu0 0.0
    %1152 = vmatpush1.msra.mxu0 0.0
    %1153 = vmatprep.subr.mxu0 0.0
    %1154 = vmatpush1.msra.mxu0 0.0
    %1155 = vmatprep.subr.mxu0 0.0
    %1156 = vmatpush1.msra.mxu0 0.0
    %1157 = vmatprep.subr.mxu0 0.0
    %1158 = vmatpush1.msra.mxu0 0.0
    %1159 = vmatprep.subr.mxu0 0.0
    %1160 = vmatpush1.msra.mxu0 0.0
    %1161 = vmatprep.mubr.f32.mxu0 0.0
    %1162 = vmatmul.mubr.f32.gmra.mrb[0].mxu0 %v1092
    %v1163 = vpop.f32.mrb[0].mxu0
    %v1164 = vadd.f32 0.0, %v1163
    %v1165 = vpop.f32.mrb[0].mxu0
    %1166 = vmatprep.mubr.f32.mxu0 0.0
    %1167 = vmatmul.mubr.f32.gmra.mrb[0].mxu0 %v1095
    %v1168 = vpop.f32.mrb[0].mxu0
    %v1169 = vadd.f32 0.0, %v1168
    %v1170 = vpop.f32.mrb[0].mxu0
    %1171 = vdwg.mxu0
    %v1173 = vsel %vm424, %v674, 0
    %v1176 = vsel %vm424, %v747, 0
    %1178 = vmatprep.subr.mxu0 0.0
    %1179 = vmatpush1.msra.mxu0 %v750
    %1180 = vmatprep.subr.mxu0 0.0
    %1181 = vmatpush1.msra.mxu0 %v751
    %1182 = vmatprep.subr.mxu0 0.0
    %1183 = vmatpush1.msra.mxu0 0.0
    %1184 = vmatprep.subr.mxu0 0.0
    %1185 = vmatpush1.msra.mxu0 0.0
    %1186 = vmatprep.subr.mxu0 0.0
    %1187 = vmatpush1.msra.mxu0 0.0
    %1188 = vmatprep.subr.mxu0 0.0
    %1189 = vmatpush1.msra.mxu0 0.0
    %1190 = vmatprep.subr.mxu0 0.0
    %1191 = vmatpush1.msra.mxu0 0.0
    %1192 = vmatprep.subr.mxu0 0.0
    %1193 = vmatpush1.msra.mxu0 0.0
    %1194 = vmatprep.subr.mxu0 0.0
    %1195 = vmatpush1.msra.mxu0 0.0
    %1196 = vmatprep.subr.mxu0 0.0
    %1197 = vmatpush1.msra.mxu0 0.0
    %1198 = vmatprep.subr.mxu0 0.0
    %1199 = vmatpush1.msra.mxu0 0.0
    %1200 = vmatprep.subr.mxu0 0.0
    %1201 = vmatpush1.msra.mxu0 0.0
    %1202 = vmatprep.subr.mxu0 0.0
    %1203 = vmatpush1.msra.mxu0 0.0
    %1204 = vmatprep.subr.mxu0 0.0
    %1205 = vmatpush1.msra.mxu0 0.0
    %1206 = vmatprep.subr.mxu0 0.0
    %1207 = vmatpush1.msra.mxu0 0.0
    %1208 = vmatprep.subr.mxu0 0.0
    %1209 = vmatpush1.msra.mxu0 0.0
    %1210 = vmatprep.subr.mxu0 0.0
    %1211 = vmatpush1.msra.mxu0 0.0
    %1212 = vmatprep.subr.mxu0 0.0
    %1213 = vmatpush1.msra.mxu0 0.0
    %1214 = vmatprep.subr.mxu0 0.0
    %1215 = vmatpush1.msra.mxu0 0.0
    %1216 = vmatprep.subr.mxu0 0.0
    %1217 = vmatpush1.msra.mxu0 0.0
    %1218 = vmatprep.subr.mxu0 0.0
    %1219 = vmatpush1.msra.mxu0 0.0
    %1220 = vmatprep.subr.mxu0 0.0
    %1221 = vmatpush1.msra.mxu0 0.0
    %1222 = vmatprep.subr.mxu0 0.0
    %1223 = vmatpush1.msra.mxu0 0.0
    %1224 = vmatprep.subr.mxu0 0.0
    %1225 = vmatpush1.msra.mxu0 0.0
    %1226 = vmatprep.subr.mxu0 0.0
    %1227 = vmatpush1.msra.mxu0 0.0
    %1228 = vmatprep.subr.mxu0 0.0
    %1229 = vmatpush1.msra.mxu0 0.0
    %1230 = vmatprep.subr.mxu0 0.0
    %1231 = vmatpush1.msra.mxu0 0.0
    %1232 = vmatprep.subr.mxu0 0.0
    %1233 = vmatpush1.msra.mxu0 0.0
    %1234 = vmatprep.subr.mxu0 0.0
    %1235 = vmatpush1.msra.mxu0 0.0
    %1236 = vmatprep.subr.mxu0 0.0
    %1237 = vmatpush1.msra.mxu0 0.0
    %1238 = vmatprep.subr.mxu0 0.0
    %1239 = vmatpush1.msra.mxu0 0.0
    %1240 = vmatprep.subr.mxu0 0.0
    %1241 = vmatpush1.msra.mxu0 0.0
    %1242 = vmatprep.mubr.f32.mxu0 0.0
    %1243 = vmatmul.mubr.f32.gmra.mrb[0].mxu0 %v1173
    %v1244 = vpop.f32.mrb[0].mxu0
    %v1245 = vadd.f32 %v1164, %v1244
    %v1246 = vpop.f32.mrb[0].mxu0
    %1247 = vmatprep.mubr.f32.mxu0 0.0
    %1248 = vmatmul.mubr.f32.gmra.mrb[0].mxu0 %v1176
    %v1249 = vpop.f32.mrb[0].mxu0
    %v1250 = vadd.f32 %v1169, %v1249
    %v1251 = vpop.f32.mrb[0].mxu0
    %1252 = vdwg.mxu0
    %v1253 = vld [vmem:[%s10] sm:$0x1]
    %v1255 = vlaneseq
    %v1256 = vshrl.u32 %v1255, 7
    %v1257 = vsub.s32 0, %v1256
    %v1258 = vrot.slane %v1253, %v1257
    %v1260 = vadd.f32 %v1245, %v1258
    %v1261 = vadd.f32 %v1250, %v1258
    %v1262 = vadd.f32 %v1260, %v141
    %v1263 = vadd.f32 %v1261, %v142
    %v1264 = vsel %vm158, %v1262, 0.0
    %1265 = vadd.xlane.f32.xlu0 %v1264
    %v1266 = vpop.xlane.xlu0 %1265
    %v1267 = vsel %vm158, %v1263, 0.0
    %1268 = vadd.xlane.f32.xlu0 %v1267
    %v1269 = vpop.xlane.xlu0 %1268
    %v1270 = vmul.f32 %v1266, 0.03125
    %v1271 = vmul.f32 %v1269, 0.03125
    %v1272 = vsub.f32 %v1262, %v1270
    %v1273 = vsub.f32 %v1263, %v1271
    %v1274 = vmul.f32 %v1272, %v1272
    %v1275 = vmul.f32 %v1273, %v1273
    %v1276 = vsel %vm158, %v1274, 0.0
    %1277 = vadd.xlane.f32.xlu0 %v1276
    %v1278 = vpop.xlane.xlu0 %1277
    %v1279 = vsel %vm158, %v1275, 0.0
    %1280 = vadd.xlane.f32.xlu0 %v1279
    %v1281 = vpop.xlane.xlu0 %1280
    %v1282 = vmul.f32 %v1278, 0.03125
    %v1283 = vmul.f32 %v1281, 0.03125
    %v1284 = vadd.f32 %v1282, 1e-05
    %v1285 = vadd.f32 %v1283, 1e-05
    %v1286 = vrsqrt.pop %v1284
    %v1287 = vrsqrt.pop %v1285
    %v1288 = vmul.f32 %v1272, %v1286
    %v1289 = vmul.f32 %v1273, %v1287
    %v1290 = vld [vmem:[%s11] sm:$0x1]
    %v1292 = vlaneseq
    %v1293 = vshrl.u32 %v1292, 7
    %v1294 = vsub.s32 0, %v1293
    %v1295 = vrot.slane %v1290, %v1294
    %v1297 = vmul.f32 %v1288, %v1295
    %v1298 = vmul.f32 %v1289, %v1295
    %v1299 = vld [vmem:[%s12] sm:$0x1]
    %v1301 = vlaneseq
    %v1302 = vshrl.u32 %v1301, 7
    %v1303 = vsub.s32 0, %v1302
    %v1304 = vrot.slane %v1299, %v1303
    %v1306 = vadd.f32 %v1297, %v1304
    %v1307 = vadd.f32 %v1298, %v1304
    %1308 = vst.msk [vmem:[#allocation14] sm:$0xff] %vm158, %v1306
    %1309 = vst.msk [vmem:[#allocation14 + $0x8] sm:$0xff] %vm158, %v1307
    // Predicated region
    $region82: #{tpu_custom_call.1} parent=1 // pred_check
      _
    $region83: #{tpu_custom_call.1} parent=1 // pred_check_branch
      %1311 = sbr.rel (0) target = $region85
    $region84: #{tpu_custom_call.1} parent=1 // pred_region
      %s1313 = ssub.s32 256, 256
      %1314 = vsyncadd [#allocation4], %s1313
      %s1315 = sshll.u32 [#allocation14], 4
      %s1316 = int_to_ptr.vmem [resolvable:$true] %s1315
      %1321 = dma.vmem_to_hbm [thread:$0]  %s1316, 256, %s13, [#allocation4], 128, 128, 8
    $region85: #{tpu_custom_call.1} parent=1 // pred_fallthru
      _
    // Predicated region
    $region86: #{tpu_custom_call.1} parent=1 // pred_check
      _
    $region87: #{tpu_custom_call.1} parent=1 // pred_check_branch
      %1323 = sbr.rel (0) target = $region89
    $region88: #{tpu_custom_call.1} parent=1 // pred_region
      %s1325 = ssub.s32 512, 512
      %1326 = vsyncadd [#allocation16], %s1325
      %s1327 = sshll.u32 [#allocation15], 4
      %s1328 = int_to_ptr.vmem [resolvable:$true] %s1327
      %1333 = dma.vmem_to_hbm [thread:$0]  %s1328, 512, %s14, [#allocation16], 128, 128, 8
    $region89: #{tpu_custom_call.1} parent=1 // pred_fallthru
      _
    // Predicated region
    $region90: #{tpu_custom_call.1} parent=1 // pred_check
      _
    $region91: #{tpu_custom_call.1} parent=1 // pred_check_branch
      %1335 = sbr.rel (0) target = $region93
    $region92: #{tpu_custom_call.1} parent=1 // pred_region
      %1336 = dma.done [#allocation4], 256
    $region93: #{tpu_custom_call.1} parent=1 // pred_fallthru
      _
    // Predicated region
    $region94: #{tpu_custom_call.1} parent=1 // pred_check
      _
    $region95: #{tpu_custom_call.1} parent=1 // pred_check_branch
      %1338 = sbr.rel (0) target = $region97
    $region96: #{tpu_custom_call.1} parent=1 // pred_region
      %1339 = dma.done [#allocation16], 512
    $region97: #{tpu_custom_call.1} parent=1 // pred_fallthru
      _
    %1340 = vsyncpa [#allocation3], 1
    %1341 = vsyncpa [#allocation6], 1
    %1342 = vsyncpa [#allocation9], 1
    %1343 = vsyncpa [#allocation12], 1
    %1344 = vsyncpa [#allocation4], 1
    %1345 = vsyncpa [#allocation16], 1

</llo_original>
